<compile_context>
chip_gen: v5e
topology: v5e:2x2
jax: 0.10.0
libtpu: 0.0.40
codegen_flags: <defaults>
</compile_context>

<pallas_src>
import math

import jax
import jax.numpy as jnp
from jax.experimental import pallas as pl
from jax.experimental.pallas import tpu as pltpu


# ----------------------------------------------------------------------------
# Fused kernel: q-projection + 3x multi-head cross attention + concat(dim=1)
# One grid step handles a block of Bt batch elements.
# ----------------------------------------------------------------------------
def _make_fused_kernel(num_heads, head_dim, seq_len, batch_block, model_dim):
    H, hd, S, Bt, D = num_heads, head_dim, seq_len, batch_block, model_dim
    R = Bt * S
    bf16, f32 = jnp.bfloat16, jnp.float32

    def kernel(t1_ref, t2_ref, t3_ref,
               qw1_ref, qw2_ref, qw3_ref, qb_ref,
               wq_ref, bq_ref, wkv_ref, bkv_ref, wo_ref, bo_ref,
               o_ref):
        # Flatten the batch block so projection matmuls see Bt*S rows (MXU M).
        t1 = t1_ref[...].reshape(R, D)            # bf16
        t2 = t2_ref[...].reshape(R, D)
        t3 = t3_ref[...].reshape(R, D)

        # q = Linear(concat(t1,t2,t3)) as three K-split matmuls, fp32 accum.
        q = (jnp.dot(t1, qw1_ref[...], preferred_element_type=f32)
             + jnp.dot(t2, qw2_ref[...], preferred_element_type=f32)
             + jnp.dot(t3, qw3_ref[...], preferred_element_type=f32)
             + qb_ref[...])                                      # (R, D) fp32
        q16 = q.astype(bf16)

        # All three attention Q-projections fused into one (D, 3D) matmul;
        # the 1/sqrt(hd) scale is pre-folded into wq/bq in the wrapper.
        qall = jnp.dot(q16, wq_ref[...], preferred_element_type=f32) \
            + bq_ref[...]                                        # (R, 3D) fp32

        kvs = (t1, t2, t3)
        for m in range(3):                       # static unroll: modalities
            # Fused K|V projection: one (D, 2D) matmul, lane-slice the result.
            kv_proj = (jnp.dot(kvs[m], wkv_ref[m], preferred_element_type=f32)
                       + bkv_ref[m])                             # (R, 2D) fp32
            qm = qall[:, m * D:(m + 1) * D].astype(bf16)
            k = kv_proj[:, :D].astype(bf16)
            v = kv_proj[:, D:].astype(bf16)

            for bi in range(Bt):                 # static unroll: batch in block
                r0 = bi * S
                qh = qm[r0:r0 + S].reshape(S, H, hd)
                kh = k[r0:r0 + S].reshape(S, H, hd)
                vh = v[r0:r0 + S].reshape(S, H, hd)

                # Head-batched scores; softmax fully in fp32.
                s = jnp.einsum("qhd,khd->hqk", qh, kh,
                               preferred_element_type=f32)       # (H, S, S)
                s = s - jnp.max(s, axis=-1, keepdims=True)
                p = jnp.exp(s)
                p = p * pl.reciprocal(jnp.sum(p, axis=-1, keepdims=True),
                                      approx=True)

                # Keep head-major layout (natural dot_general output order);
                # avoids the (H,S,hd)->(S,H,hd) relayout.
                ctx = jnp.einsum("hqk,khd->hqd", p.astype(bf16), vh,
                                 preferred_element_type=f32)     # (H, S, hd)

                # Output projection as per-head accumulation (no concat/reshape
                # of ctx back to (S, D)).
                out = jnp.dot(ctx[0].astype(bf16), wo_ref[m, 0],
                              preferred_element_type=f32)
                for h in range(1, H):
                    out += jnp.dot(ctx[h].astype(bf16), wo_ref[m, h],
                                   preferred_element_type=f32)
                out += bo_ref[m]                                  # (S, D) fp32

                # Dense, tile-aligned store into this (batch, modality) plane.
                o_ref[bi, m, :, :] = out.astype(o_ref.dtype)

    return kernel


def _pick_batch_block(B, S, target_rows=256, min_grid=2):
    """Largest Bt dividing B with Bt*S <= target_rows, keeping >= min_grid
    parallel grid steps when possible (v7x has 2 TensorCores)."""
    bt = max(1, min(B, target_rows // max(S, 1)))
    while bt > 1 and B % bt:
        bt -= 1
    while bt > 1 and B // bt < min_grid:
        bt = max(1, bt // 2)
        while bt > 1 and B % bt:
            bt -= 1
    return bt


def _vmem_budget_bytes(Bt, S, D, H):
    f32, bf16, db = 4, 2, 2                      # db = double-buffered blocks
    R = Bt * S
    inputs = db * 3 * Bt * S * D * bf16
    output = db * Bt * 3 * S * D * f32
    weights = db * (3 * D * D + D * 3 * D + 3 * D * 2 * D + 3 * D * D) * bf16
    biases = db * (D + 3 * D + 3 * 2 * D + 3 * D) * f32
    live = (R * 4 * D + R * 2 * D + 2 * H * S * S + H * S * (D // H)) * f32
    return inputs + output + weights + biases + live


def tri_modal_cross_attention(params, t1, t2, t3, num_heads):
    """t1, t2, t3: (B, S, D). Returns (B, 3*S, D) = cat(attn1, attn2, attn3, dim=1)."""
    B, S, D = t1.shape
    H = num_heads
    hd = D // H
    scale = 1.0 / math.sqrt(hd)
    cdt = jnp.bfloat16                      # MXU operand dtype

    # ---- one-time wrapper-side weight prep (transpose / fuse / fold / cast) --
    qw_t = params["q_linear_w"].T.astype(cdt)            # (3D, D)
    qw1, qw2, qw3 = qw_t[:D], qw_t[D:2 * D], qw_t[2 * D:]
    qb = params["q_linear_b"].reshape(1, D).astype(jnp.float32)

    attn = [params["attn1"], params["attn2"], params["attn3"]]
    # Fused Q projection across the three attentions, softmax scale folded in.
    wq_all = jnp.concatenate([p["wq"].T * scale for p in attn],
                             axis=1).astype(cdt)                     # (D, 3D)
    bq_all = jnp.concatenate([(p["bq"] * scale).reshape(1, D) for p in attn],
                             axis=1).astype(jnp.float32)             # (1, 3D)
    # Per-modality fused K|V projection.
    wkv = jnp.stack([jnp.concatenate([p["wk"].T, p["wv"].T], axis=1)
                     for p in attn]).astype(cdt)                     # (3, D, 2D)
    bkv = jnp.stack([jnp.concatenate([p["bk"], p["bv"]]).reshape(1, 2 * D)
                     for p in attn]).astype(jnp.float32)             # (3, 1, 2D)
    # Output projection, stored per-head (head-major rows of wo.T).
    wo = jnp.stack([p["wo"].T for p in attn]).reshape(3, H, hd, D).astype(cdt)
    bo = jnp.stack([p["bo"].reshape(1, D) for p in attn]).astype(jnp.float32)

    t1c, t2c, t3c = (x.astype(cdt) for x in (t1, t2, t3))

    Bt = _pick_batch_block(B, S)
    grid = (B // Bt,)
    kernel = _make_fused_kernel(H, hd, S, Bt, D)

    seq_spec = pl.BlockSpec((Bt, S, D), lambda b: (b, 0, 0))
    qw_spec = pl.BlockSpec((D, D), lambda b: (0, 0))
    qb_spec = pl.BlockSpec((1, D), lambda b: (0, 0))
    wq_spec = pl.BlockSpec((D, 3 * D), lambda b: (0, 0))
    bq_spec = pl.BlockSpec((1, 3 * D), lambda b: (0, 0))
    wkv_spec = pl.BlockSpec((3, D, 2 * D), lambda b: (0, 0, 0))
    bkv_spec = pl.BlockSpec((3, 1, 2 * D), lambda b: (0, 0, 0))
    wo_spec = pl.BlockSpec((3, H, hd, D), lambda b: (0, 0, 0, 0))
    bo_spec = pl.BlockSpec((3, 1, D), lambda b: (0, 0, 0))
    out_spec = pl.BlockSpec((Bt, 3, S, D), lambda b: (b, 0, 0, 0))

    flops = int(30 * B * S * D * D + 12 * B * S * S * D)
    transcendentals = int(3 * B * H * S * S)
    bytes_accessed = int(3 * B * S * D * 2
                         + (3 * D * D + D * 3 * D + 3 * D * 2 * D + 3 * D * D) * 2
                         + (D + 3 * D + 3 * 2 * D + 3 * D) * 4
                         + B * 3 * S * D * 4)
    cost = pl.CostEstimate(flops=flops, transcendentals=transcendentals,
                           bytes_accessed=bytes_accessed)

    vmem_limit = int(min(max(2 * _vmem_budget_bytes(Bt, S, D, H), 32 * 2**20),
                         64 * 2**20))

    out4 = pl.pallas_call(
        kernel,
        out_shape=jax.ShapeDtypeStruct((B, 3, S, D), t1.dtype),
        grid_spec=pltpu.PrefetchScalarGridSpec(
            num_scalar_prefetch=0,
            grid=grid,
            in_specs=[seq_spec, seq_spec, seq_spec,
                      qw_spec, qw_spec, qw_spec, qb_spec,
                      wq_spec, bq_spec, wkv_spec, bkv_spec, wo_spec, bo_spec],
            out_specs=out_spec,
        ),
        compiler_params=pltpu.CompilerParams(
            dimension_semantics=("parallel",),
            vmem_limit_bytes=vmem_limit,
        ),
        cost_estimate=cost,
    )(t1c, t2c, t3c, qw1, qw2, qw3, qb, wq_all, bq_all, wkv, bkv, wo, bo)

    # cat(dim=1) of the three per-modality outputs == row-major reshape (free).
    return out4.reshape(B, 3 * S, D)


# ----------------------------------------------------------------------------
# Parameter init (torch-like layouts: Linear weights are (out, in))
# ----------------------------------------------------------------------------
def init_params(key, input_dim, num_heads):
    D = input_dim

    def mk(shape, k):
        return jax.random.normal(k, shape, dtype=jnp.float32) * 0.05

    def mha_params(k):
        ks = jax.random.split(k, 7)
        return dict(
            wq=mk((D, D), ks[0]), wk=mk((D, D), ks[1]), wv=mk((D, D), ks[2]),
            bq=mk((D,), ks[3]), bk=mk((D,), ks[4]), bv=mk((D,), ks[5]),
            wo=mk((D, D), ks[6]), bo=jnp.zeros((D,), jnp.float32),
        )

    k1, k2, k3, k4, k5 = jax.random.split(key, 5)
    return dict(
        attn1=mha_params(k1),
        attn2=mha_params(k2),
        attn3=mha_params(k3),
        q_linear_w=mk((D, 3 * D), k4),   # (out=D, in=3D), torch layout
        q_linear_b=mk((D,), k5),
    )


# ----------------------------------------------------------------------------
# Pure-JAX fp32 reference (silent sanity check)
# ----------------------------------------------------------------------------
def _mha_ref(q, kv, p, num_heads):
    B, S, D = q.shape
    hd = D // num_heads
    Q = q @ p["wq"].T + p["bq"]
    K = kv @ p["wk"].T + p["bk"]
    V = kv @ p["wv"].T + p["bv"]
    Q = Q.reshape(B, S, num_heads, hd).transpose(0, 2, 1, 3)
    K = K.reshape(B, S, num_heads, hd).transpose(0, 2, 1, 3)
    V = V.reshape(B, S, num_heads, hd).transpose(0, 2, 1, 3)
    s = jnp.einsum("bhqd,bhkd->bhqk", Q, K) / math.sqrt(hd)
    a = jax.nn.softmax(s, axis=-1)
    ctx = jnp.einsum("bhqk,bhkd->bhqd", a, V)
    ctx = ctx.transpose(0, 2, 1, 3).reshape(B, S, D)
    return ctx @ p["wo"].T + p["bo"]


def _ref(params, t1, t2, t3, num_heads):
    q_in = jnp.concatenate([t1, t2, t3], axis=-1)
    q = q_in @ params["q_linear_w"].T + params["q_linear_b"]
    a1 = _mha_ref(q, t1, params["attn1"], num_heads)
    a2 = _mha_ref(q, t2, params["attn2"], num_heads)
    a3 = _mha_ref(q, t3, params["attn3"], num_heads)
    return jnp.concatenate([a1, a2, a3], axis=1)


if __name__ == "__main__":
    B, S, D, H = 2, 8, 32, 4   # batch, seq, input_dim, num_heads

    key = jax.random.PRNGKey(0)
    kp, k1, k2, k3 = jax.random.split(key, 4)
    params = init_params(kp, D, H)
    t1 = jax.random.normal(k1, (B, S, D), dtype=jnp.float32)
    t2 = jax.random.normal(k2, (B, S, D), dtype=jnp.float32)
    t3 = jax.random.normal(k3, (B, S, D), dtype=jnp.float32)

    out = tri_modal_cross_attention(params, t1, t2, t3, H)
    out = jax.block_until_ready(out)

    ref = _ref(params, t1, t2, t3, H)
    assert out.shape == (B, 3 * S, D), out.shape
    # tolerance covers bf16 MXU operands + EUP approximate softmax reciprocal
    assert jnp.allclose(out, ref, atol=3e-2, rtol=3e-2), "mismatch vs reference"

    print("KERNEL_OK")
</pallas_src>

<mosaic_0001>
module attributes {stable_mosaic.version = 11 : i64} {
  func.func @kernel(%arg0: i32, %arg1: memref<1x8x32xbf16, #tpu.memory_space<vmem>>, %arg2: memref<1x8x32xbf16, #tpu.memory_space<vmem>>, %arg3: memref<1x8x32xbf16, #tpu.memory_space<vmem>>, %arg4: memref<32x32xbf16, #tpu.memory_space<vmem>>, %arg5: memref<32x32xbf16, #tpu.memory_space<vmem>>, %arg6: memref<32x32xbf16, #tpu.memory_space<vmem>>, %arg7: memref<1x32xf32, #tpu.memory_space<vmem>>, %arg8: memref<32x96xbf16, #tpu.memory_space<vmem>>, %arg9: memref<1x96xf32, #tpu.memory_space<vmem>>, %arg10: memref<3x32x64xbf16, #tpu.memory_space<vmem>>, %arg11: memref<3x1x64xf32, #tpu.memory_space<vmem>>, %arg12: memref<3x4x8x32xbf16, #tpu.memory_space<vmem>>, %arg13: memref<3x1x32xf32, #tpu.memory_space<vmem>>, %arg14: memref<1x3x8x32xf32, #tpu.memory_space<vmem>>) attributes {dimension_semantics = [#tpu.dimension_semantics<parallel>], iteration_bounds = array<i64: 2>, scalar_prefetch = 0 : i64, scratch_operands = 0 : i64, tpu.core_type = #tpu.core_type<tc>, window_params = [{transform_indices = @transform_0, window_bounds = array<i64: 1, 8, 32>}, {transform_indices = @transform_1, window_bounds = array<i64: 1, 8, 32>}, {transform_indices = @transform_2, window_bounds = array<i64: 1, 8, 32>}, {pipeline_mode = #tpu.pipeline_mode<synchronous>, transform_indices = @transform_3, window_bounds = array<i64: 32, 32>}, {pipeline_mode = #tpu.pipeline_mode<synchronous>, transform_indices = @transform_4, window_bounds = array<i64: 32, 32>}, {pipeline_mode = #tpu.pipeline_mode<synchronous>, transform_indices = @transform_5, window_bounds = array<i64: 32, 32>}, {pipeline_mode = #tpu.pipeline_mode<synchronous>, transform_indices = @transform_6, window_bounds = array<i64: 1, 32>}, {pipeline_mode = #tpu.pipeline_mode<synchronous>, transform_indices = @transform_7, window_bounds = array<i64: 32, 96>}, {pipeline_mode = #tpu.pipeline_mode<synchronous>, transform_indices = @transform_8, window_bounds = array<i64: 1, 96>}, {pipeline_mode = #tpu.pipeline_mode<synchronous>, transform_indices = @transform_9, window_bounds = array<i64: 3, 32, 64>}, {pipeline_mode = #tpu.pipeline_mode<synchronous>, transform_indices = @transform_10, window_bounds = array<i64: 3, 1, 64>}, {pipeline_mode = #tpu.pipeline_mode<synchronous>, transform_indices = @transform_11, window_bounds = array<i64: 3, 4, 8, 32>}, {pipeline_mode = #tpu.pipeline_mode<synchronous>, transform_indices = @transform_12, window_bounds = array<i64: 3, 1, 32>}, {transform_indices = @transform_13, window_bounds = array<i64: 1, 3, 8, 32>}]} {
    %c0 = arith.constant 0 : index
    %c0_0 = arith.constant 0 : index
    %c0_1 = arith.constant 0 : index
    %0 = vector.load %arg1[%c0, %c0_0, %c0_1] : memref<1x8x32xbf16, #tpu.memory_space<vmem>>, vector<1x8x32xbf16>
    %1 = vector.shape_cast %0 : vector<1x8x32xbf16> to vector<8x32xbf16>
    %c0_2 = arith.constant 0 : index
    %c0_3 = arith.constant 0 : index
    %c0_4 = arith.constant 0 : index
    %2 = vector.load %arg2[%c0_2, %c0_3, %c0_4] : memref<1x8x32xbf16, #tpu.memory_space<vmem>>, vector<1x8x32xbf16>
    %3 = vector.shape_cast %2 : vector<1x8x32xbf16> to vector<8x32xbf16>
    %c0_5 = arith.constant 0 : index
    %c0_6 = arith.constant 0 : index
    %c0_7 = arith.constant 0 : index
    %4 = vector.load %arg3[%c0_5, %c0_6, %c0_7] : memref<1x8x32xbf16, #tpu.memory_space<vmem>>, vector<1x8x32xbf16>
    %5 = vector.shape_cast %4 : vector<1x8x32xbf16> to vector<8x32xbf16>
    %c0_8 = arith.constant 0 : index
    %c0_9 = arith.constant 0 : index
    %6 = vector.load %arg4[%c0_8, %c0_9] : memref<32x32xbf16, #tpu.memory_space<vmem>>, vector<32x32xbf16>
    %cst = arith.constant dense<0.000000e+00> : vector<8x32xf32>
    %7 = tpu.matmul %1, %6, %cst {dimension_numbers = #tpu.dot_dimension_numbers<[1], [0], [0], [1], [0, 0, 1, 1], [], []>} : vector<8x32xbf16>, vector<32x32xbf16>, vector<8x32xf32> -> vector<8x32xf32>
    %c0_10 = arith.constant 0 : index
    %c0_11 = arith.constant 0 : index
    %8 = vector.load %arg5[%c0_10, %c0_11] : memref<32x32xbf16, #tpu.memory_space<vmem>>, vector<32x32xbf16>
    %cst_12 = arith.constant dense<0.000000e+00> : vector<8x32xf32>
    %9 = tpu.matmul %3, %8, %cst_12 {dimension_numbers = #tpu.dot_dimension_numbers<[1], [0], [0], [1], [0, 0, 1, 1], [], []>} : vector<8x32xbf16>, vector<32x32xbf16>, vector<8x32xf32> -> vector<8x32xf32>
    %10 = arith.addf %7, %9 : vector<8x32xf32>
    %c0_13 = arith.constant 0 : index
    %c0_14 = arith.constant 0 : index
    %11 = vector.load %arg6[%c0_13, %c0_14] : memref<32x32xbf16, #tpu.memory_space<vmem>>, vector<32x32xbf16>
    %cst_15 = arith.constant dense<0.000000e+00> : vector<8x32xf32>
    %12 = tpu.matmul %5, %11, %cst_15 {dimension_numbers = #tpu.dot_dimension_numbers<[1], [0], [0], [1], [0, 0, 1, 1], [], []>} : vector<8x32xbf16>, vector<32x32xbf16>, vector<8x32xf32> -> vector<8x32xf32>
    %13 = arith.addf %10, %12 : vector<8x32xf32>
    %c0_16 = arith.constant 0 : index
    %c0_17 = arith.constant 0 : index
    %14 = vector.load %arg7[%c0_16, %c0_17] : memref<1x32xf32, #tpu.memory_space<vmem>>, vector<1x32xf32>
    %15 = vector.broadcast %14 : vector<1x32xf32> to vector<8x32xf32>
    %16 = arith.addf %13, %15 : vector<8x32xf32>
    %17 = arith.truncf %16 : vector<8x32xf32> to vector<8x32xbf16>
    %c0_18 = arith.constant 0 : index
    %c0_19 = arith.constant 0 : index
    %18 = vector.load %arg8[%c0_18, %c0_19] : memref<32x96xbf16, #tpu.memory_space<vmem>>, vector<32x96xbf16>
    %cst_20 = arith.constant dense<0.000000e+00> : vector<8x96xf32>
    %19 = tpu.matmul %17, %18, %cst_20 {dimension_numbers = #tpu.dot_dimension_numbers<[1], [0], [0], [1], [0, 0, 1, 1], [], []>} : vector<8x32xbf16>, vector<32x96xbf16>, vector<8x96xf32> -> vector<8x96xf32>
    %c0_21 = arith.constant 0 : index
    %c0_22 = arith.constant 0 : index
    %20 = vector.load %arg9[%c0_21, %c0_22] : memref<1x96xf32, #tpu.memory_space<vmem>>, vector<1x96xf32>
    %21 = vector.broadcast %20 : vector<1x96xf32> to vector<8x96xf32>
    %22 = arith.addf %19, %21 : vector<8x96xf32>
    %c0_23 = arith.constant 0 : index
    %c0_24 = arith.constant 0 : index
    %c0_25 = arith.constant 0 : index
    %23 = vector.load %arg10[%c0_23, %c0_24, %c0_25] : memref<3x32x64xbf16, #tpu.memory_space<vmem>>, vector<1x32x64xbf16>
    %24 = vector.shape_cast %23 : vector<1x32x64xbf16> to vector<32x64xbf16>
    %cst_26 = arith.constant dense<0.000000e+00> : vector<8x64xf32>
    %25 = tpu.matmul %1, %24, %cst_26 {dimension_numbers = #tpu.dot_dimension_numbers<[1], [0], [0], [1], [0, 0, 1, 1], [], []>} : vector<8x32xbf16>, vector<32x64xbf16>, vector<8x64xf32> -> vector<8x64xf32>
    %c0_27 = arith.constant 0 : index
    %c0_28 = arith.constant 0 : index
    %c0_29 = arith.constant 0 : index
    %26 = vector.load %arg11[%c0_27, %c0_28, %c0_29] : memref<3x1x64xf32, #tpu.memory_space<vmem>>, vector<1x1x64xf32>
    %27 = vector.shape_cast %26 : vector<1x1x64xf32> to vector<1x64xf32>
    %28 = vector.broadcast %27 : vector<1x64xf32> to vector<8x64xf32>
    %29 = arith.addf %25, %28 : vector<8x64xf32>
    %30 = vector.extract_strided_slice %22 {offsets = [0, 0], sizes = [8, 32], strides = [1, 1]} : vector<8x96xf32> to vector<8x32xf32>
    %31 = arith.truncf %30 : vector<8x32xf32> to vector<8x32xbf16>
    %32 = vector.extract_strided_slice %29 {offsets = [0, 0], sizes = [8, 32], strides = [1, 1]} : vector<8x64xf32> to vector<8x32xf32>
    %33 = arith.truncf %32 : vector<8x32xf32> to vector<8x32xbf16>
    %34 = vector.extract_strided_slice %29 {offsets = [0, 32], sizes = [8, 32], strides = [1, 1]} : vector<8x64xf32> to vector<8x32xf32>
    %35 = arith.truncf %34 : vector<8x32xf32> to vector<8x32xbf16>
    %36 = vector.shape_cast %31 : vector<8x32xbf16> to vector<8x4x8xbf16>
    %37 = vector.shape_cast %33 : vector<8x32xbf16> to vector<8x4x8xbf16>
    %38 = vector.shape_cast %35 : vector<8x32xbf16> to vector<8x4x8xbf16>
    "tpu.trace_start"() <{level = 10 : i32, message = "qhd,khd->hqk"}> : () -> ()
    %cst_30 = arith.constant dense<0.000000e+00> : vector<4x8x8xf32>
    %39 = tpu.matmul %36, %37, %cst_30 {dimension_numbers = #tpu.dot_dimension_numbers<[2], [2], [0], [0], [0, 1, 0, 0, 1, 0], [1], [1]>} : vector<8x4x8xbf16>, vector<8x4x8xbf16>, vector<4x8x8xf32> -> vector<4x8x8xf32>
    "tpu.trace_stop"() : () -> ()
    %cst_31 = arith.constant dense<0xFF800000> : vector<4x8xf32>
    %40 = vector.multi_reduction <maximumf>, %39, %cst_31 [2] : vector<4x8x8xf32> to vector<4x8xf32>
    %41 = vector.shape_cast %40 : vector<4x8xf32> to vector<4x8x1xf32>
    %42 = vector.broadcast %41 : vector<4x8x1xf32> to vector<4x8x8xf32>
    %43 = arith.subf %39, %42 : vector<4x8x8xf32>
    %44 = math.exp %43 : vector<4x8x8xf32>
    %cst_32 = arith.constant dense<0.000000e+00> : vector<4x8xf32>
    %45 = vector.multi_reduction <add>, %44, %cst_32 [2] : vector<4x8x8xf32> to vector<4x8xf32>
    %46 = vector.shape_cast %45 : vector<4x8xf32> to vector<4x8x1xf32>
    %47 = tpu.reciprocal %46 {approx = true} : vector<4x8x1xf32> -> vector<4x8x1xf32>
    %48 = vector.broadcast %47 : vector<4x8x1xf32> to vector<4x8x8xf32>
    %49 = arith.mulf %44, %48 : vector<4x8x8xf32>
    %50 = arith.truncf %49 : vector<4x8x8xf32> to vector<4x8x8xbf16>
    "tpu.trace_start"() <{level = 10 : i32, message = "hqk,khd->hqd"}> : () -> ()
    %cst_33 = arith.constant dense<0.000000e+00> : vector<4x8x8xf32>
    %51 = tpu.matmul %50, %38, %cst_33 {dimension_numbers = #tpu.dot_dimension_numbers<[2], [0], [1], [2], [0, 0, 0, 1, 1, 2], [0], [1]>} : vector<4x8x8xbf16>, vector<8x4x8xbf16>, vector<4x8x8xf32> -> vector<4x8x8xf32>
    "tpu.trace_stop"() : () -> ()
    %52 = vector.extract_strided_slice %51 {offsets = [0, 0, 0], sizes = [1, 8, 8], strides = [1, 1, 1]} : vector<4x8x8xf32> to vector<1x8x8xf32>
    %53 = vector.shape_cast %52 : vector<1x8x8xf32> to vector<8x8xf32>
    %54 = arith.truncf %53 : vector<8x8xf32> to vector<8x8xbf16>
    %c0_34 = arith.constant 0 : index
    %c0_35 = arith.constant 0 : index
    %c0_36 = arith.constant 0 : index
    %c0_37 = arith.constant 0 : index
    %55 = vector.load %arg12[%c0_34, %c0_35, %c0_36, %c0_37] : memref<3x4x8x32xbf16, #tpu.memory_space<vmem>>, vector<1x1x8x32xbf16>
    %56 = vector.shape_cast %55 : vector<1x1x8x32xbf16> to vector<8x32xbf16>
    %cst_38 = arith.constant dense<0.000000e+00> : vector<8x32xf32>
    %57 = tpu.matmul %54, %56, %cst_38 {dimension_numbers = #tpu.dot_dimension_numbers<[1], [0], [0], [1], [0, 0, 1, 1], [], []>} : vector<8x8xbf16>, vector<8x32xbf16>, vector<8x32xf32> -> vector<8x32xf32>
    %58 = vector.extract_strided_slice %51 {offsets = [1, 0, 0], sizes = [1, 8, 8], strides = [1, 1, 1]} : vector<4x8x8xf32> to vector<1x8x8xf32>
    %59 = vector.shape_cast %58 : vector<1x8x8xf32> to vector<8x8xf32>
    %60 = arith.truncf %59 : vector<8x8xf32> to vector<8x8xbf16>
    %c0_39 = arith.constant 0 : index
    %c1 = arith.constant 1 : index
    %c0_40 = arith.constant 0 : index
    %c0_41 = arith.constant 0 : index
    %61 = vector.load %arg12[%c0_39, %c1, %c0_40, %c0_41] : memref<3x4x8x32xbf16, #tpu.memory_space<vmem>>, vector<1x1x8x32xbf16>
    %62 = vector.shape_cast %61 : vector<1x1x8x32xbf16> to vector<8x32xbf16>
    %cst_42 = arith.constant dense<0.000000e+00> : vector<8x32xf32>
    %63 = tpu.matmul %60, %62, %cst_42 {dimension_numbers = #tpu.dot_dimension_numbers<[1], [0], [0], [1], [0, 0, 1, 1], [], []>} : vector<8x8xbf16>, vector<8x32xbf16>, vector<8x32xf32> -> vector<8x32xf32>
    %64 = arith.addf %57, %63 : vector<8x32xf32>
    %65 = vector.extract_strided_slice %51 {offsets = [2, 0, 0], sizes = [1, 8, 8], strides = [1, 1, 1]} : vector<4x8x8xf32> to vector<1x8x8xf32>
    %66 = vector.shape_cast %65 : vector<1x8x8xf32> to vector<8x8xf32>
    %67 = arith.truncf %66 : vector<8x8xf32> to vector<8x8xbf16>
    %c0_43 = arith.constant 0 : index
    %c2 = arith.constant 2 : index
    %c0_44 = arith.constant 0 : index
    %c0_45 = arith.constant 0 : index
    %68 = vector.load %arg12[%c0_43, %c2, %c0_44, %c0_45] : memref<3x4x8x32xbf16, #tpu.memory_space<vmem>>, vector<1x1x8x32xbf16>
    %69 = vector.shape_cast %68 : vector<1x1x8x32xbf16> to vector<8x32xbf16>
    %cst_46 = arith.constant dense<0.000000e+00> : vector<8x32xf32>
    %70 = tpu.matmul %67, %69, %cst_46 {dimension_numbers = #tpu.dot_dimension_numbers<[1], [0], [0], [1], [0, 0, 1, 1], [], []>} : vector<8x8xbf16>, vector<8x32xbf16>, vector<8x32xf32> -> vector<8x32xf32>
    %71 = arith.addf %64, %70 : vector<8x32xf32>
    %72 = vector.extract_strided_slice %51 {offsets = [3, 0, 0], sizes = [1, 8, 8], strides = [1, 1, 1]} : vector<4x8x8xf32> to vector<1x8x8xf32>
    %73 = vector.shape_cast %72 : vector<1x8x8xf32> to vector<8x8xf32>
    %74 = arith.truncf %73 : vector<8x8xf32> to vector<8x8xbf16>
    %c0_47 = arith.constant 0 : index
    %c3 = arith.constant 3 : index
    %c0_48 = arith.constant 0 : index
    %c0_49 = arith.constant 0 : index
    %75 = vector.load %arg12[%c0_47, %c3, %c0_48, %c0_49] : memref<3x4x8x32xbf16, #tpu.memory_space<vmem>>, vector<1x1x8x32xbf16>
    %76 = vector.shape_cast %75 : vector<1x1x8x32xbf16> to vector<8x32xbf16>
    %cst_50 = arith.constant dense<0.000000e+00> : vector<8x32xf32>
    %77 = tpu.matmul %74, %76, %cst_50 {dimension_numbers = #tpu.dot_dimension_numbers<[1], [0], [0], [1], [0, 0, 1, 1], [], []>} : vector<8x8xbf16>, vector<8x32xbf16>, vector<8x32xf32> -> vector<8x32xf32>
    %78 = arith.addf %71, %77 : vector<8x32xf32>
    %c0_51 = arith.constant 0 : index
    %c0_52 = arith.constant 0 : index
    %c0_53 = arith.constant 0 : index
    %79 = vector.load %arg13[%c0_51, %c0_52, %c0_53] : memref<3x1x32xf32, #tpu.memory_space<vmem>>, vector<1x1x32xf32>
    %80 = vector.shape_cast %79 : vector<1x1x32xf32> to vector<1x32xf32>
    %81 = vector.broadcast %80 : vector<1x32xf32> to vector<8x32xf32>
    %82 = arith.addf %78, %81 : vector<8x32xf32>
    %c0_54 = arith.constant 0 : index
    %c0_55 = arith.constant 0 : index
    %c0_56 = arith.constant 0 : index
    %c0_57 = arith.constant 0 : index
    %83 = vector.load %arg14[%c0_54, %c0_55, %c0_56, %c0_57] : memref<1x3x8x32xf32, #tpu.memory_space<vmem>>, vector<1x1x8x32xf32>
    %84 = vector.shape_cast %83 : vector<1x1x8x32xf32> to vector<8x32xf32>
    %85 = vector.shape_cast %82 : vector<8x32xf32> to vector<1x1x8x32xf32>
    tpu.vector_store %arg14[%c0_54, %c0_55, %c0_56, %c0_57], %85 {strides = array<i32>} : memref<1x3x8x32xf32, #tpu.memory_space<vmem>>, vector<1x1x8x32xf32>,
    %c1_58 = arith.constant 1 : index
    %c0_59 = arith.constant 0 : index
    %c0_60 = arith.constant 0 : index
    %86 = vector.load %arg10[%c1_58, %c0_59, %c0_60] : memref<3x32x64xbf16, #tpu.memory_space<vmem>>, vector<1x32x64xbf16>
    %87 = vector.shape_cast %86 : vector<1x32x64xbf16> to vector<32x64xbf16>
    %cst_61 = arith.constant dense<0.000000e+00> : vector<8x64xf32>
    %88 = tpu.matmul %3, %87, %cst_61 {dimension_numbers = #tpu.dot_dimension_numbers<[1], [0], [0], [1], [0, 0, 1, 1], [], []>} : vector<8x32xbf16>, vector<32x64xbf16>, vector<8x64xf32> -> vector<8x64xf32>
    %c1_62 = arith.constant 1 : index
    %c0_63 = arith.constant 0 : index
    %c0_64 = arith.constant 0 : index
    %89 = vector.load %arg11[%c1_62, %c0_63, %c0_64] : memref<3x1x64xf32, #tpu.memory_space<vmem>>, vector<1x1x64xf32>
    %90 = vector.shape_cast %89 : vector<1x1x64xf32> to vector<1x64xf32>
    %91 = vector.broadcast %90 : vector<1x64xf32> to vector<8x64xf32>
    %92 = arith.addf %88, %91 : vector<8x64xf32>
    %93 = vector.extract_strided_slice %22 {offsets = [0, 32], sizes = [8, 32], strides = [1, 1]} : vector<8x96xf32> to vector<8x32xf32>
    %94 = arith.truncf %93 : vector<8x32xf32> to vector<8x32xbf16>
    %95 = vector.extract_strided_slice %92 {offsets = [0, 0], sizes = [8, 32], strides = [1, 1]} : vector<8x64xf32> to vector<8x32xf32>
    %96 = arith.truncf %95 : vector<8x32xf32> to vector<8x32xbf16>
    %97 = vector.extract_strided_slice %92 {offsets = [0, 32], sizes = [8, 32], strides = [1, 1]} : vector<8x64xf32> to vector<8x32xf32>
    %98 = arith.truncf %97 : vector<8x32xf32> to vector<8x32xbf16>
    %99 = vector.shape_cast %94 : vector<8x32xbf16> to vector<8x4x8xbf16>
    %100 = vector.shape_cast %96 : vector<8x32xbf16> to vector<8x4x8xbf16>
    %101 = vector.shape_cast %98 : vector<8x32xbf16> to vector<8x4x8xbf16>
    "tpu.trace_start"() <{level = 10 : i32, message = "qhd,khd->hqk"}> : () -> ()
    %cst_65 = arith.constant dense<0.000000e+00> : vector<4x8x8xf32>
    %102 = tpu.matmul %99, %100, %cst_65 {dimension_numbers = #tpu.dot_dimension_numbers<[2], [2], [0], [0], [0, 1, 0, 0, 1, 0], [1], [1]>} : vector<8x4x8xbf16>, vector<8x4x8xbf16>, vector<4x8x8xf32> -> vector<4x8x8xf32>
    "tpu.trace_stop"() : () -> ()
    %cst_66 = arith.constant dense<0xFF800000> : vector<4x8xf32>
    %103 = vector.multi_reduction <maximumf>, %102, %cst_66 [2] : vector<4x8x8xf32> to vector<4x8xf32>
    %104 = vector.shape_cast %103 : vector<4x8xf32> to vector<4x8x1xf32>
    %105 = vector.broadcast %104 : vector<4x8x1xf32> to vector<4x8x8xf32>
    %106 = arith.subf %102, %105 : vector<4x8x8xf32>
    %107 = math.exp %106 : vector<4x8x8xf32>
    %cst_67 = arith.constant dense<0.000000e+00> : vector<4x8xf32>
    %108 = vector.multi_reduction <add>, %107, %cst_67 [2] : vector<4x8x8xf32> to vector<4x8xf32>
    %109 = vector.shape_cast %108 : vector<4x8xf32> to vector<4x8x1xf32>
    %110 = tpu.reciprocal %109 {approx = true} : vector<4x8x1xf32> -> vector<4x8x1xf32>
    %111 = vector.broadcast %110 : vector<4x8x1xf32> to vector<4x8x8xf32>
    %112 = arith.mulf %107, %111 : vector<4x8x8xf32>
    %113 = arith.truncf %112 : vector<4x8x8xf32> to vector<4x8x8xbf16>
    "tpu.trace_start"() <{level = 10 : i32, message = "hqk,khd->hqd"}> : () -> ()
    %cst_68 = arith.constant dense<0.000000e+00> : vector<4x8x8xf32>
    %114 = tpu.matmul %113, %101, %cst_68 {dimension_numbers = #tpu.dot_dimension_numbers<[2], [0], [1], [2], [0, 0, 0, 1, 1, 2], [0], [1]>} : vector<4x8x8xbf16>, vector<8x4x8xbf16>, vector<4x8x8xf32> -> vector<4x8x8xf32>
    "tpu.trace_stop"() : () -> ()
    %115 = vector.extract_strided_slice %114 {offsets = [0, 0, 0], sizes = [1, 8, 8], strides = [1, 1, 1]} : vector<4x8x8xf32> to vector<1x8x8xf32>
    %116 = vector.shape_cast %115 : vector<1x8x8xf32> to vector<8x8xf32>
    %117 = arith.truncf %116 : vector<8x8xf32> to vector<8x8xbf16>
    %c1_69 = arith.constant 1 : index
    %c0_70 = arith.constant 0 : index
    %c0_71 = arith.constant 0 : index
    %c0_72 = arith.constant 0 : index
    %118 = vector.load %arg12[%c1_69, %c0_70, %c0_71, %c0_72] : memref<3x4x8x32xbf16, #tpu.memory_space<vmem>>, vector<1x1x8x32xbf16>
    %119 = vector.shape_cast %118 : vector<1x1x8x32xbf16> to vector<8x32xbf16>
    %cst_73 = arith.constant dense<0.000000e+00> : vector<8x32xf32>
    %120 = tpu.matmul %117, %119, %cst_73 {dimension_numbers = #tpu.dot_dimension_numbers<[1], [0], [0], [1], [0, 0, 1, 1], [], []>} : vector<8x8xbf16>, vector<8x32xbf16>, vector<8x32xf32> -> vector<8x32xf32>
    %121 = vector.extract_strided_slice %114 {offsets = [1, 0, 0], sizes = [1, 8, 8], strides = [1, 1, 1]} : vector<4x8x8xf32> to vector<1x8x8xf32>
    %122 = vector.shape_cast %121 : vector<1x8x8xf32> to vector<8x8xf32>
    %123 = arith.truncf %122 : vector<8x8xf32> to vector<8x8xbf16>
    %c1_74 = arith.constant 1 : index
    %c1_75 = arith.constant 1 : index
    %c0_76 = arith.constant 0 : index
    %c0_77 = arith.constant 0 : index
    %124 = vector.load %arg12[%c1_74, %c1_75, %c0_76, %c0_77] : memref<3x4x8x32xbf16, #tpu.memory_space<vmem>>, vector<1x1x8x32xbf16>
    %125 = vector.shape_cast %124 : vector<1x1x8x32xbf16> to vector<8x32xbf16>
    %cst_78 = arith.constant dense<0.000000e+00> : vector<8x32xf32>
    %126 = tpu.matmul %123, %125, %cst_78 {dimension_numbers = #tpu.dot_dimension_numbers<[1], [0], [0], [1], [0, 0, 1, 1], [], []>} : vector<8x8xbf16>, vector<8x32xbf16>, vector<8x32xf32> -> vector<8x32xf32>
    %127 = arith.addf %120, %126 : vector<8x32xf32>
    %128 = vector.extract_strided_slice %114 {offsets = [2, 0, 0], sizes = [1, 8, 8], strides = [1, 1, 1]} : vector<4x8x8xf32> to vector<1x8x8xf32>
    %129 = vector.shape_cast %128 : vector<1x8x8xf32> to vector<8x8xf32>
    %130 = arith.truncf %129 : vector<8x8xf32> to vector<8x8xbf16>
    %c1_79 = arith.constant 1 : index
    %c2_80 = arith.constant 2 : index
    %c0_81 = arith.constant 0 : index
    %c0_82 = arith.constant 0 : index
    %131 = vector.load %arg12[%c1_79, %c2_80, %c0_81, %c0_82] : memref<3x4x8x32xbf16, #tpu.memory_space<vmem>>, vector<1x1x8x32xbf16>
    %132 = vector.shape_cast %131 : vector<1x1x8x32xbf16> to vector<8x32xbf16>
    %cst_83 = arith.constant dense<0.000000e+00> : vector<8x32xf32>
    %133 = tpu.matmul %130, %132, %cst_83 {dimension_numbers = #tpu.dot_dimension_numbers<[1], [0], [0], [1], [0, 0, 1, 1], [], []>} : vector<8x8xbf16>, vector<8x32xbf16>, vector<8x32xf32> -> vector<8x32xf32>
    %134 = arith.addf %127, %133 : vector<8x32xf32>
    %135 = vector.extract_strided_slice %114 {offsets = [3, 0, 0], sizes = [1, 8, 8], strides = [1, 1, 1]} : vector<4x8x8xf32> to vector<1x8x8xf32>
    %136 = vector.shape_cast %135 : vector<1x8x8xf32> to vector<8x8xf32>
    %137 = arith.truncf %136 : vector<8x8xf32> to vector<8x8xbf16>
    %c1_84 = arith.constant 1 : index
    %c3_85 = arith.constant 3 : index
    %c0_86 = arith.constant 0 : index
    %c0_87 = arith.constant 0 : index
    %138 = vector.load %arg12[%c1_84, %c3_85, %c0_86, %c0_87] : memref<3x4x8x32xbf16, #tpu.memory_space<vmem>>, vector<1x1x8x32xbf16>
    %139 = vector.shape_cast %138 : vector<1x1x8x32xbf16> to vector<8x32xbf16>
    %cst_88 = arith.constant dense<0.000000e+00> : vector<8x32xf32>
    %140 = tpu.matmul %137, %139, %cst_88 {dimension_numbers = #tpu.dot_dimension_numbers<[1], [0], [0], [1], [0, 0, 1, 1], [], []>} : vector<8x8xbf16>, vector<8x32xbf16>, vector<8x32xf32> -> vector<8x32xf32>
    %141 = arith.addf %134, %140 : vector<8x32xf32>
    %c1_89 = arith.constant 1 : index
    %c0_90 = arith.constant 0 : index
    %c0_91 = arith.constant 0 : index
    %142 = vector.load %arg13[%c1_89, %c0_90, %c0_91] : memref<3x1x32xf32, #tpu.memory_space<vmem>>, vector<1x1x32xf32>
    %143 = vector.shape_cast %142 : vector<1x1x32xf32> to vector<1x32xf32>
    %144 = vector.broadcast %143 : vector<1x32xf32> to vector<8x32xf32>
    %145 = arith.addf %141, %144 : vector<8x32xf32>
    %c0_92 = arith.constant 0 : index
    %c1_93 = arith.constant 1 : index
    %c0_94 = arith.constant 0 : index
    %c0_95 = arith.constant 0 : index
    %146 = vector.load %arg14[%c0_92, %c1_93, %c0_94, %c0_95] : memref<1x3x8x32xf32, #tpu.memory_space<vmem>>, vector<1x1x8x32xf32>
    %147 = vector.shape_cast %146 : vector<1x1x8x32xf32> to vector<8x32xf32>
    %148 = vector.shape_cast %145 : vector<8x32xf32> to vector<1x1x8x32xf32>
    tpu.vector_store %arg14[%c0_92, %c1_93, %c0_94, %c0_95], %148 {strides = array<i32>} : memref<1x3x8x32xf32, #tpu.memory_space<vmem>>, vector<1x1x8x32xf32>,
    %c2_96 = arith.constant 2 : index
    %c0_97 = arith.constant 0 : index
    %c0_98 = arith.constant 0 : index
    %149 = vector.load %arg10[%c2_96, %c0_97, %c0_98] : memref<3x32x64xbf16, #tpu.memory_space<vmem>>, vector<1x32x64xbf16>
    %150 = vector.shape_cast %149 : vector<1x32x64xbf16> to vector<32x64xbf16>
    %cst_99 = arith.constant dense<0.000000e+00> : vector<8x64xf32>
    %151 = tpu.matmul %5, %150, %cst_99 {dimension_numbers = #tpu.dot_dimension_numbers<[1], [0], [0], [1], [0, 0, 1, 1], [], []>} : vector<8x32xbf16>, vector<32x64xbf16>, vector<8x64xf32> -> vector<8x64xf32>
    %c2_100 = arith.constant 2 : index
    %c0_101 = arith.constant 0 : index
    %c0_102 = arith.constant 0 : index
    %152 = vector.load %arg11[%c2_100, %c0_101, %c0_102] : memref<3x1x64xf32, #tpu.memory_space<vmem>>, vector<1x1x64xf32>
    %153 = vector.shape_cast %152 : vector<1x1x64xf32> to vector<1x64xf32>
    %154 = vector.broadcast %153 : vector<1x64xf32> to vector<8x64xf32>
    %155 = arith.addf %151, %154 : vector<8x64xf32>
    %156 = vector.extract_strided_slice %22 {offsets = [0, 64], sizes = [8, 32], strides = [1, 1]} : vector<8x96xf32> to vector<8x32xf32>
    %157 = arith.truncf %156 : vector<8x32xf32> to vector<8x32xbf16>
    %158 = vector.extract_strided_slice %155 {offsets = [0, 0], sizes = [8, 32], strides = [1, 1]} : vector<8x64xf32> to vector<8x32xf32>
    %159 = arith.truncf %158 : vector<8x32xf32> to vector<8x32xbf16>
    %160 = vector.extract_strided_slice %155 {offsets = [0, 32], sizes = [8, 32], strides = [1, 1]} : vector<8x64xf32> to vector<8x32xf32>
    %161 = arith.truncf %160 : vector<8x32xf32> to vector<8x32xbf16>
    %162 = vector.shape_cast %157 : vector<8x32xbf16> to vector<8x4x8xbf16>
    %163 = vector.shape_cast %159 : vector<8x32xbf16> to vector<8x4x8xbf16>
    %164 = vector.shape_cast %161 : vector<8x32xbf16> to vector<8x4x8xbf16>
    "tpu.trace_start"() <{level = 10 : i32, message = "qhd,khd->hqk"}> : () -> ()
    %cst_103 = arith.constant dense<0.000000e+00> : vector<4x8x8xf32>
    %165 = tpu.matmul %162, %163, %cst_103 {dimension_numbers = #tpu.dot_dimension_numbers<[2], [2], [0], [0], [0, 1, 0, 0, 1, 0], [1], [1]>} : vector<8x4x8xbf16>, vector<8x4x8xbf16>, vector<4x8x8xf32> -> vector<4x8x8xf32>
    "tpu.trace_stop"() : () -> ()
    %cst_104 = arith.constant dense<0xFF800000> : vector<4x8xf32>
    %166 = vector.multi_reduction <maximumf>, %165, %cst_104 [2] : vector<4x8x8xf32> to vector<4x8xf32>
    %167 = vector.shape_cast %166 : vector<4x8xf32> to vector<4x8x1xf32>
    %168 = vector.broadcast %167 : vector<4x8x1xf32> to vector<4x8x8xf32>
    %169 = arith.subf %165, %168 : vector<4x8x8xf32>
    %170 = math.exp %169 : vector<4x8x8xf32>
    %cst_105 = arith.constant dense<0.000000e+00> : vector<4x8xf32>
    %171 = vector.multi_reduction <add>, %170, %cst_105 [2] : vector<4x8x8xf32> to vector<4x8xf32>
    %172 = vector.shape_cast %171 : vector<4x8xf32> to vector<4x8x1xf32>
    %173 = tpu.reciprocal %172 {approx = true} : vector<4x8x1xf32> -> vector<4x8x1xf32>
    %174 = vector.broadcast %173 : vector<4x8x1xf32> to vector<4x8x8xf32>
    %175 = arith.mulf %170, %174 : vector<4x8x8xf32>
    %176 = arith.truncf %175 : vector<4x8x8xf32> to vector<4x8x8xbf16>
    "tpu.trace_start"() <{level = 10 : i32, message = "hqk,khd->hqd"}> : () -> ()
    %cst_106 = arith.constant dense<0.000000e+00> : vector<4x8x8xf32>
    %177 = tpu.matmul %176, %164, %cst_106 {dimension_numbers = #tpu.dot_dimension_numbers<[2], [0], [1], [2], [0, 0, 0, 1, 1, 2], [0], [1]>} : vector<4x8x8xbf16>, vector<8x4x8xbf16>, vector<4x8x8xf32> -> vector<4x8x8xf32>
    "tpu.trace_stop"() : () -> ()
    %178 = vector.extract_strided_slice %177 {offsets = [0, 0, 0], sizes = [1, 8, 8], strides = [1, 1, 1]} : vector<4x8x8xf32> to vector<1x8x8xf32>
    %179 = vector.shape_cast %178 : vector<1x8x8xf32> to vector<8x8xf32>
    %180 = arith.truncf %179 : vector<8x8xf32> to vector<8x8xbf16>
    %c2_107 = arith.constant 2 : index
    %c0_108 = arith.constant 0 : index
    %c0_109 = arith.constant 0 : index
    %c0_110 = arith.constant 0 : index
    %181 = vector.load %arg12[%c2_107, %c0_108, %c0_109, %c0_110] : memref<3x4x8x32xbf16, #tpu.memory_space<vmem>>, vector<1x1x8x32xbf16>
    %182 = vector.shape_cast %181 : vector<1x1x8x32xbf16> to vector<8x32xbf16>
    %cst_111 = arith.constant dense<0.000000e+00> : vector<8x32xf32>
    %183 = tpu.matmul %180, %182, %cst_111 {dimension_numbers = #tpu.dot_dimension_numbers<[1], [0], [0], [1], [0, 0, 1, 1], [], []>} : vector<8x8xbf16>, vector<8x32xbf16>, vector<8x32xf32> -> vector<8x32xf32>
    %184 = vector.extract_strided_slice %177 {offsets = [1, 0, 0], sizes = [1, 8, 8], strides = [1, 1, 1]} : vector<4x8x8xf32> to vector<1x8x8xf32>
    %185 = vector.shape_cast %184 : vector<1x8x8xf32> to vector<8x8xf32>
    %186 = arith.truncf %185 : vector<8x8xf32> to vector<8x8xbf16>
    %c2_112 = arith.constant 2 : index
    %c1_113 = arith.constant 1 : index
    %c0_114 = arith.constant 0 : index
    %c0_115 = arith.constant 0 : index
    %187 = vector.load %arg12[%c2_112, %c1_113, %c0_114, %c0_115] : memref<3x4x8x32xbf16, #tpu.memory_space<vmem>>, vector<1x1x8x32xbf16>
    %188 = vector.shape_cast %187 : vector<1x1x8x32xbf16> to vector<8x32xbf16>
    %cst_116 = arith.constant dense<0.000000e+00> : vector<8x32xf32>
    %189 = tpu.matmul %186, %188, %cst_116 {dimension_numbers = #tpu.dot_dimension_numbers<[1], [0], [0], [1], [0, 0, 1, 1], [], []>} : vector<8x8xbf16>, vector<8x32xbf16>, vector<8x32xf32> -> vector<8x32xf32>
    %190 = arith.addf %183, %189 : vector<8x32xf32>
    %191 = vector.extract_strided_slice %177 {offsets = [2, 0, 0], sizes = [1, 8, 8], strides = [1, 1, 1]} : vector<4x8x8xf32> to vector<1x8x8xf32>
    %192 = vector.shape_cast %191 : vector<1x8x8xf32> to vector<8x8xf32>
    %193 = arith.truncf %192 : vector<8x8xf32> to vector<8x8xbf16>
    %c2_117 = arith.constant 2 : index
    %c2_118 = arith.constant 2 : index
    %c0_119 = arith.constant 0 : index
    %c0_120 = arith.constant 0 : index
    %194 = vector.load %arg12[%c2_117, %c2_118, %c0_119, %c0_120] : memref<3x4x8x32xbf16, #tpu.memory_space<vmem>>, vector<1x1x8x32xbf16>
    %195 = vector.shape_cast %194 : vector<1x1x8x32xbf16> to vector<8x32xbf16>
    %cst_121 = arith.constant dense<0.000000e+00> : vector<8x32xf32>
    %196 = tpu.matmul %193, %195, %cst_121 {dimension_numbers = #tpu.dot_dimension_numbers<[1], [0], [0], [1], [0, 0, 1, 1], [], []>} : vector<8x8xbf16>, vector<8x32xbf16>, vector<8x32xf32> -> vector<8x32xf32>
    %197 = arith.addf %190, %196 : vector<8x32xf32>
    %198 = vector.extract_strided_slice %177 {offsets = [3, 0, 0], sizes = [1, 8, 8], strides = [1, 1, 1]} : vector<4x8x8xf32> to vector<1x8x8xf32>
    %199 = vector.shape_cast %198 : vector<1x8x8xf32> to vector<8x8xf32>
    %200 = arith.truncf %199 : vector<8x8xf32> to vector<8x8xbf16>
    %c2_122 = arith.constant 2 : index
    %c3_123 = arith.constant 3 : index
    %c0_124 = arith.constant 0 : index
    %c0_125 = arith.constant 0 : index
    %201 = vector.load %arg12[%c2_122, %c3_123, %c0_124, %c0_125] : memref<3x4x8x32xbf16, #tpu.memory_space<vmem>>, vector<1x1x8x32xbf16>
    %202 = vector.shape_cast %201 : vector<1x1x8x32xbf16> to vector<8x32xbf16>
    %cst_126 = arith.constant dense<0.000000e+00> : vector<8x32xf32>
    %203 = tpu.matmul %200, %202, %cst_126 {dimension_numbers = #tpu.dot_dimension_numbers<[1], [0], [0], [1], [0, 0, 1, 1], [], []>} : vector<8x8xbf16>, vector<8x32xbf16>, vector<8x32xf32> -> vector<8x32xf32>
    %204 = arith.addf %197, %203 : vector<8x32xf32>
    %c2_127 = arith.constant 2 : index
    %c0_128 = arith.constant 0 : index
    %c0_129 = arith.constant 0 : index
    %205 = vector.load %arg13[%c2_127, %c0_128, %c0_129] : memref<3x1x32xf32, #tpu.memory_space<vmem>>, vector<1x1x32xf32>
    %206 = vector.shape_cast %205 : vector<1x1x32xf32> to vector<1x32xf32>
    %207 = vector.broadcast %206 : vector<1x32xf32> to vector<8x32xf32>
    %208 = arith.addf %204, %207 : vector<8x32xf32>
    %c0_130 = arith.constant 0 : index
    %c2_131 = arith.constant 2 : index
    %c0_132 = arith.constant 0 : index
    %c0_133 = arith.constant 0 : index
    %209 = vector.load %arg14[%c0_130, %c2_131, %c0_132, %c0_133] : memref<1x3x8x32xf32, #tpu.memory_space<vmem>>, vector<1x1x8x32xf32>
    %210 = vector.shape_cast %209 : vector<1x1x8x32xf32> to vector<8x32xf32>
    %211 = vector.shape_cast %208 : vector<8x32xf32> to vector<1x1x8x32xf32>
    tpu.vector_store %arg14[%c0_130, %c2_131, %c0_132, %c0_133], %211 {strides = array<i32>} : memref<1x3x8x32xf32, #tpu.memory_space<vmem>>, vector<1x1x8x32xf32>,
    return
  }
  func.func @transform_0(%arg0: i32) -> (i32, i32, i32) {
    %c0_i32 = arith.constant 0 : i32
    %c0_i32_0 = arith.constant 0 : i32
    %c0_i32_1 = arith.constant 0 : i32
    return %arg0, %c0_i32, %c0_i32_0 : i32, i32, i32
  }
  func.func @transform_1(%arg0: i32) -> (i32, i32, i32) {
    %c0_i32 = arith.constant 0 : i32
    %c0_i32_0 = arith.constant 0 : i32
    %c0_i32_1 = arith.constant 0 : i32
    return %arg0, %c0_i32, %c0_i32_0 : i32, i32, i32
  }
  func.func @transform_2(%arg0: i32) -> (i32, i32, i32) {
    %c0_i32 = arith.constant 0 : i32
    %c0_i32_0 = arith.constant 0 : i32
    %c0_i32_1 = arith.constant 0 : i32
    return %arg0, %c0_i32, %c0_i32_0 : i32, i32, i32
  }
  func.func @transform_3(%arg0: i32) -> (i32, i32) {
    %c0_i32 = arith.constant 0 : i32
    %c0_i32_0 = arith.constant 0 : i32
    %c0_i32_1 = arith.constant 0 : i32
    return %c0_i32, %c0_i32_0 : i32, i32
  }
  func.func @transform_4(%arg0: i32) -> (i32, i32) {
    %c0_i32 = arith.constant 0 : i32
    %c0_i32_0 = arith.constant 0 : i32
    %c0_i32_1 = arith.constant 0 : i32
    return %c0_i32, %c0_i32_0 : i32, i32
  }
  func.func @transform_5(%arg0: i32) -> (i32, i32) {
    %c0_i32 = arith.constant 0 : i32
    %c0_i32_0 = arith.constant 0 : i32
    %c0_i32_1 = arith.constant 0 : i32
    return %c0_i32, %c0_i32_0 : i32, i32
  }
  func.func @transform_6(%arg0: i32) -> (i32, i32) {
    %c0_i32 = arith.constant 0 : i32
    %c0_i32_0 = arith.constant 0 : i32
    %c0_i32_1 = arith.constant 0 : i32
    return %c0_i32, %c0_i32_0 : i32, i32
  }
  func.func @transform_7(%arg0: i32) -> (i32, i32) {
    %c0_i32 = arith.constant 0 : i32
    %c0_i32_0 = arith.constant 0 : i32
    %c0_i32_1 = arith.constant 0 : i32
    return %c0_i32, %c0_i32_0 : i32, i32
  }
  func.func @transform_8(%arg0: i32) -> (i32, i32) {
    %c0_i32 = arith.constant 0 : i32
    %c0_i32_0 = arith.constant 0 : i32
    %c0_i32_1 = arith.constant 0 : i32
    return %c0_i32, %c0_i32_0 : i32, i32
  }
  func.func @transform_9(%arg0: i32) -> (i32, i32, i32) {
    %c0_i32 = arith.constant 0 : i32
    %c0_i32_0 = arith.constant 0 : i32
    %c0_i32_1 = arith.constant 0 : i32
    %c0_i32_2 = arith.constant 0 : i32
    return %c0_i32, %c0_i32_0, %c0_i32_1 : i32, i32, i32
  }
  func.func @transform_10(%arg0: i32) -> (i32, i32, i32) {
    %c0_i32 = arith.constant 0 : i32
    %c0_i32_0 = arith.constant 0 : i32
    %c0_i32_1 = arith.constant 0 : i32
    %c0_i32_2 = arith.constant 0 : i32
    return %c0_i32, %c0_i32_0, %c0_i32_1 : i32, i32, i32
  }
  func.func @transform_11(%arg0: i32) -> (i32, i32, i32, i32) {
    %c0_i32 = arith.constant 0 : i32
    %c0_i32_0 = arith.constant 0 : i32
    %c0_i32_1 = arith.constant 0 : i32
    %c0_i32_2 = arith.constant 0 : i32
    %c0_i32_3 = arith.constant 0 : i32
    return %c0_i32, %c0_i32_0, %c0_i32_1, %c0_i32_2 : i32, i32, i32, i32
  }
  func.func @transform_12(%arg0: i32) -> (i32, i32, i32) {
    %c0_i32 = arith.constant 0 : i32
    %c0_i32_0 = arith.constant 0 : i32
    %c0_i32_1 = arith.constant 0 : i32
    %c0_i32_2 = arith.constant 0 : i32
    return %c0_i32, %c0_i32_0, %c0_i32_1 : i32, i32, i32
  }
  func.func @transform_13(%arg0: i32) -> (i32, i32, i32, i32) {
    %c0_i32 = arith.constant 0 : i32
    %c0_i32_0 = arith.constant 0 : i32
    %c0_i32_1 = arith.constant 0 : i32
    %c0_i32_2 = arith.constant 0 : i32
    return %arg0, %c0_i32, %c0_i32_0, %c0_i32_1 : i32, i32, i32, i32
  }
}

</mosaic_0001>

<llo_original>
// kernel: tpu_custom_call.1
$region0: #{tpu_custom_call.1}
  #allocation0 [shape = 'u32[]', space=smem, size = 0x4, offset = 0x4, fixed_abs, tag = 'smem constant byte address 0x4 - core index']
  #allocation1 [shape = 'u32[72,128]{1,0:T(1,128)}', space=vmem, size = 0x9000, scoped, tag = 'internal scratch']
  %s0 = inlined_call_operand.hbm [shape: bf16[2,8,32], index: 0, kind: input, shape index: {}]
  %s1 = inlined_call_operand.hbm [shape: bf16[2,8,32], index: 1, kind: input, shape index: {}]
  %s2 = inlined_call_operand.hbm [shape: bf16[2,8,32], index: 2, kind: input, shape index: {}]
  %s3 = inlined_call_operand.hbm [shape: bf16[32,32], index: 3, kind: input, shape index: {}]
  %s4 = inlined_call_operand.hbm [shape: bf16[32,32], index: 4, kind: input, shape index: {}]
  %s5 = inlined_call_operand.hbm [shape: bf16[32,32], index: 5, kind: input, shape index: {}]
  %s6 = inlined_call_operand.hbm [shape: f32[1,32], index: 6, kind: input, shape index: {}]
  %s7 = inlined_call_operand.hbm [shape: bf16[32,96], index: 7, kind: input, shape index: {}]
  %s8 = inlined_call_operand.vmem [shape: f32[1,96], index: 8, kind: input, shape index: {}]
  %s9 = inlined_call_operand.hbm [shape: bf16[3,32,64], index: 9, kind: input, shape index: {}]
  %s10 = inlined_call_operand.vmem [shape: f32[3,1,64], index: 10, kind: input, shape index: {}]
  %s11 = inlined_call_operand.hbm [shape: bf16[3,4,8,32], index: 11, kind: input, shape index: {}]
  %s12 = inlined_call_operand.vmem [shape: f32[3,1,32], index: 12, kind: input, shape index: {}]
  %s13 = inlined_call_operand.hbm [shape: f32[2,3,8,32], index: 13, kind: output, shape index: {}]
  %s14 = sld [smem:[#allocation0]]
  $region125: #{tpu_custom_call.1} parent=0
    _
  %s16 = ssub.s32 1, %s14
  %s17 = scalar_select 0, %s16, %s14
  $region1: #{tpu_custom_call.1} parent=0
    #allocation2 [shape = 'u8[4096]{0}', space=vmem, size = 0x1000, scoped, tag = 'input window, operand 0']
    #allocation3 [shape = 's32[2]{0}', space=sflag, size = 0x8, scoped, tag = 'scoped memory for tpu_custom_call.1']
    #allocation4 [shape = 's32[2]{0}', space=sflag, size = 0x8, scoped, tag = 'scoped memory for tpu_custom_call.1']
    #allocation5 [shape = 'u8[4096]{0}', space=vmem, size = 0x1000, scoped, tag = 'input window, operand 1']
    #allocation6 [shape = 's32[2]{0}', space=sflag, size = 0x8, scoped, tag = 'scoped memory for tpu_custom_call.1']
    #allocation7 [shape = 'u8[4096]{0}', space=vmem, size = 0x1000, scoped, tag = 'input window, operand 2']
    #allocation8 [shape = 'u8[8192]{0}', space=vmem, size = 0x2000, scoped, tag = 'input window, operand 3, single buffered']
    #allocation9 [shape = 's32[1]{0}', space=sflag, size = 0x4, scoped, tag = 'scoped memory for tpu_custom_call.1']
    #allocation10 [shape = 'u8[8192]{0}', space=vmem, size = 0x2000, scoped, tag = 'input window, operand 4, single buffered']
    #allocation11 [shape = 'u8[8192]{0}', space=vmem, size = 0x2000, scoped, tag = 'input window, operand 5, single buffered']
    #allocation12 [shape = 's32[1]{0}', space=sflag, size = 0x4, scoped, tag = 'scoped memory for tpu_custom_call.1']
    #allocation13 [shape = 'u8[512]{0}', space=vmem, size = 0x400, scoped, tag = 'input window, operand 6, single buffered']
    #allocation14 [shape = 'u8[8192]{0}', space=vmem, size = 0x2000, scoped, tag = 'input window, operand 7, single buffered']
    #allocation15 [shape = 's32[1]{0}', space=sflag, size = 0x4, scoped, tag = 'scoped memory for tpu_custom_call.1']
    #allocation16 [shape = 'u8[24576]{0}', space=vmem, size = 0x6000, scoped, tag = 'input window, operand 9, single buffered']
    #allocation17 [shape = 'u8[24576]{0}', space=vmem, size = 0x6000, scoped, tag = 'input window, operand 11, single buffered']
    #allocation18 [shape = 's32[1]{0}', space=sflag, size = 0x4, scoped, tag = 'scoped memory for tpu_custom_call.1']
    #allocation19 [shape = 'u8[24576]{0}', space=vmem, size = 0x6000, scoped, tag = 'output window, operand 0']
    %18 = vsyncpa [#allocation3], 0
    %s19 = scalar_lea.sflag [#allocation3], 1
    %20 = vsyncpa %s19, 0
    %21 = vsyncpa [#allocation6], 0
    %s22 = scalar_lea.sflag [#allocation6], 1
    %23 = vsyncpa %s22, 0
    %24 = vsyncpa [#allocation9], 0
    %25 = vsyncpa [#allocation12], 0
    %26 = vsyncpa [#allocation15], 0
    %27 = vsyncpa [#allocation18], 0
    %28 = vsyncpa [#allocation4], 0
    %s29 = scalar_lea.sflag [#allocation4], 1
    %30 = vsyncpa %s29, 0
    loop: start=0, step=1, limit=4
    $region2: #{tpu_custom_call.1} parent=1 // loop_pre_header
      _
    $region3: #{tpu_custom_call.1} parent=1 // loop_header
      %s32 = sphi 0, %s36
      %p33 = scmp.ge.s32.totalorder %s32, 4
      %s42 = sphi 0, %s44
      %s45 = sphi 0, %s42
      %s46 = sphi 0, %s45
      %s62 = sphi 0, %s46
      %s68 = sphi 0, %s70
      %s71 = sphi 0, %s68
      %s72 = sphi 0, %s71
      %s88 = sphi 0, %s72
      %s94 = sphi 0, %s96
      %s97 = sphi 0, %s94
      %s98 = sphi 0, %s97
      %s114 = sphi 0, %s98
      %s118 = sphi 0, %s118
      %s120 = sphi 0, %s118
      %s121 = sphi 0, %s120
      %s135 = sphi 0, %s121
      %s139 = sphi 0, %s139
      %s141 = sphi 0, %s139
      %s142 = sphi 0, %s141
      %s156 = sphi 0, %s142
      %s160 = sphi 0, %s160
      %s162 = sphi 0, %s160
      %s163 = sphi 0, %s162
      %s177 = sphi 0, %s163
      %s181 = sphi 0, %s181
      %s183 = sphi 0, %s181
      %s184 = sphi 0, %s183
      %s198 = sphi 0, %s184
      %s202 = sphi 0, %s202
      %s204 = sphi 0, %s202
      %s205 = sphi 0, %s204
      %s219 = sphi 0, %s205
      %s223 = sphi 0, %s223
      %s225 = sphi 0, %s223
      %s226 = sphi 0, %s225
      %s240 = sphi 0, %s226
      %s244 = sphi 0, %s244
      %s246 = sphi 0, %s244
      %s247 = sphi 0, %s246
      %s261 = sphi 0, %s247
      %s265 = sphi 0, %s265
      %s267 = sphi 0, %s265
      %s268 = sphi 0, %s267
      %s282 = sphi 0, %s268
      %s286 = sphi 0, %s286
      %s288 = sphi 0, %s286
      %s289 = sphi 0, %s288
      %s303 = sphi 0, %s289
      %s307 = sphi 0, %s307
      %s309 = sphi 0, %s307
      %s310 = sphi 0, %s309
      %s324 = sphi 0, %s310
      %s330 = sphi 0, %s332
      %s333 = sphi 0, %s330
      %s334 = sphi 0, %s333
      %s350 = sphi 0, %s334
    $region4: #{tpu_custom_call.1} parent=1 // loop_header_branch
      %35 = sbr.rel (%p33) target = $region8
    $region5: #{tpu_custom_call.1} parent=1 // loop_body
      %s37 = ssub.s32 %s32, 1
      %s38 = ssub.s32 %s32, 2
      %s39 = sadd.s32 %s32, 1
      %s40 = ssub.s32 %s32, %s39
      %p41 = scmp.eq.s32.totalorder %s40, 0
      %s43 = sadd.s32 %s42, 1
      %s44 = scalar_select %p41, %s42, %s43
      %p47 = pneg %p41
      %p48 = scmp.eq.s32.totalorder %s32, 1
      %p49 = por %p47, %p48
      %p50 = scmp.ne.s32.totalorder %s42, %s45
      %p51 = scmp.eq.s32.totalorder %s32, 0
      %p52 = por %p50, %p51
      %p53 = scmp.ne.s32.totalorder %s42, %s45
      %p54 = scmp.eq.s32.totalorder %s37, 1
      %p55 = por %p53, %p54
      %p56 = scmp.ne.s32.totalorder %s45, %s46
      %p57 = scmp.eq.s32.totalorder %s37, 0
      %p58 = por %p56, %p57
      %p59 = scmp.ne.s32.totalorder %s45, %s46
      %p60 = scmp.eq.s32.totalorder %s38, 1
      %p61 = por %p59, %p60
      %p63 = scmp.ne.s32.totalorder %s46, %s62
      %p64 = scmp.eq.s32.totalorder %s38, 0
      %p65 = por %p63, %p64
      %s66 = ssub.s32 %s32, %s39
      %p67 = scmp.eq.s32.totalorder %s66, 0
      %s69 = sadd.s32 %s68, 1
      %s70 = scalar_select %p67, %s68, %s69
      %p73 = pneg %p67
      %p74 = scmp.eq.s32.totalorder %s32, 1
      %p75 = por %p73, %p74
      %p76 = scmp.ne.s32.totalorder %s68, %s71
      %p77 = scmp.eq.s32.totalorder %s32, 0
      %p78 = por %p76, %p77
      %p79 = scmp.ne.s32.totalorder %s68, %s71
      %p80 = scmp.eq.s32.totalorder %s37, 1
      %p81 = por %p79, %p80
      %p82 = scmp.ne.s32.totalorder %s71, %s72
      %p83 = scmp.eq.s32.totalorder %s37, 0
      %p84 = por %p82, %p83
      %p85 = scmp.ne.s32.totalorder %s71, %s72
      %p86 = scmp.eq.s32.totalorder %s38, 1
      %p87 = por %p85, %p86
      %p89 = scmp.ne.s32.totalorder %s72, %s88
      %p90 = scmp.eq.s32.totalorder %s38, 0
      %p91 = por %p89, %p90
      %s92 = ssub.s32 %s32, %s39
      %p93 = scmp.eq.s32.totalorder %s92, 0
      %s95 = sadd.s32 %s94, 1
      %s96 = scalar_select %p93, %s94, %s95
      %p99 = pneg %p93
      %p100 = scmp.eq.s32.totalorder %s32, 1
      %p101 = por %p99, %p100
      %p102 = scmp.ne.s32.totalorder %s94, %s97
      %p103 = scmp.eq.s32.totalorder %s32, 0
      %p104 = por %p102, %p103
      %p105 = scmp.ne.s32.totalorder %s94, %s97
      %p106 = scmp.eq.s32.totalorder %s37, 1
      %p107 = por %p105, %p106
      %p108 = scmp.ne.s32.totalorder %s97, %s98
      %p109 = scmp.eq.s32.totalorder %s37, 0
      %p110 = por %p108, %p109
      %p111 = scmp.ne.s32.totalorder %s97, %s98
      %p112 = scmp.eq.s32.totalorder %s38, 1
      %p113 = por %p111, %p112
      %p115 = scmp.ne.s32.totalorder %s98, %s114
      %p116 = scmp.eq.s32.totalorder %s38, 0
      %p117 = por %p115, %p116
      %s119 = sadd.s32 %s118, 1
      %p122 = scmp.eq.s32.totalorder %s32, 1
      %p123 = scmp.ne.s32.totalorder %s118, %s120
      %p124 = scmp.eq.s32.totalorder %s32, 0
      %p125 = por %p123, %p124
      %p126 = scmp.ne.s32.totalorder %s118, %s120
      %p127 = scmp.eq.s32.totalorder %s37, 1
      %p128 = por %p126, %p127
      %p129 = scmp.ne.s32.totalorder %s120, %s121
      %p130 = scmp.eq.s32.totalorder %s37, 0
      %p131 = por %p129, %p130
      %p132 = scmp.ne.s32.totalorder %s120, %s121
      %p133 = scmp.eq.s32.totalorder %s38, 1
      %p134 = por %p132, %p133
      %p136 = scmp.ne.s32.totalorder %s121, %s135
      %p137 = scmp.eq.s32.totalorder %s38, 0
      %p138 = por %p136, %p137
      %s140 = sadd.s32 %s139, 1
      %p143 = scmp.eq.s32.totalorder %s32, 1
      %p144 = scmp.ne.s32.totalorder %s139, %s141
      %p145 = scmp.eq.s32.totalorder %s32, 0
      %p146 = por %p144, %p145
      %p147 = scmp.ne.s32.totalorder %s139, %s141
      %p148 = scmp.eq.s32.totalorder %s37, 1
      %p149 = por %p147, %p148
      %p150 = scmp.ne.s32.totalorder %s141, %s142
      %p151 = scmp.eq.s32.totalorder %s37, 0
      %p152 = por %p150, %p151
      %p153 = scmp.ne.s32.totalorder %s141, %s142
      %p154 = scmp.eq.s32.totalorder %s38, 1
      %p155 = por %p153, %p154
      %p157 = scmp.ne.s32.totalorder %s142, %s156
      %p158 = scmp.eq.s32.totalorder %s38, 0
      %p159 = por %p157, %p158
      %s161 = sadd.s32 %s160, 1
      %p164 = scmp.eq.s32.totalorder %s32, 1
      %p165 = scmp.ne.s32.totalorder %s160, %s162
      %p166 = scmp.eq.s32.totalorder %s32, 0
      %p167 = por %p165, %p166
      %p168 = scmp.ne.s32.totalorder %s160, %s162
      %p169 = scmp.eq.s32.totalorder %s37, 1
      %p170 = por %p168, %p169
      %p171 = scmp.ne.s32.totalorder %s162, %s163
      %p172 = scmp.eq.s32.totalorder %s37, 0
      %p173 = por %p171, %p172
      %p174 = scmp.ne.s32.totalorder %s162, %s163
      %p175 = scmp.eq.s32.totalorder %s38, 1
      %p176 = por %p174, %p175
      %p178 = scmp.ne.s32.totalorder %s163, %s177
      %p179 = scmp.eq.s32.totalorder %s38, 0
      %p180 = por %p178, %p179
      %s182 = sadd.s32 %s181, 1
      %p185 = scmp.eq.s32.totalorder %s32, 1
      %p186 = scmp.ne.s32.totalorder %s181, %s183
      %p187 = scmp.eq.s32.totalorder %s32, 0
      %p188 = por %p186, %p187
      %p189 = scmp.ne.s32.totalorder %s181, %s183
      %p190 = scmp.eq.s32.totalorder %s37, 1
      %p191 = por %p189, %p190
      %p192 = scmp.ne.s32.totalorder %s183, %s184
      %p193 = scmp.eq.s32.totalorder %s37, 0
      %p194 = por %p192, %p193
      %p195 = scmp.ne.s32.totalorder %s183, %s184
      %p196 = scmp.eq.s32.totalorder %s38, 1
      %p197 = por %p195, %p196
      %p199 = scmp.ne.s32.totalorder %s184, %s198
      %p200 = scmp.eq.s32.totalorder %s38, 0
      %p201 = por %p199, %p200
      %s203 = sadd.s32 %s202, 1
      %p206 = scmp.eq.s32.totalorder %s32, 1
      %p207 = scmp.ne.s32.totalorder %s202, %s204
      %p208 = scmp.eq.s32.totalorder %s32, 0
      %p209 = por %p207, %p208
      %p210 = scmp.ne.s32.totalorder %s202, %s204
      %p211 = scmp.eq.s32.totalorder %s37, 1
      %p212 = por %p210, %p211
      %p213 = scmp.ne.s32.totalorder %s204, %s205
      %p214 = scmp.eq.s32.totalorder %s37, 0
      %p215 = por %p213, %p214
      %p216 = scmp.ne.s32.totalorder %s204, %s205
      %p217 = scmp.eq.s32.totalorder %s38, 1
      %p218 = por %p216, %p217
      %p220 = scmp.ne.s32.totalorder %s205, %s219
      %p221 = scmp.eq.s32.totalorder %s38, 0
      %p222 = por %p220, %p221
      %s224 = sadd.s32 %s223, 1
      %p227 = scmp.eq.s32.totalorder %s32, 1
      %p228 = scmp.ne.s32.totalorder %s223, %s225
      %p229 = scmp.eq.s32.totalorder %s32, 0
      %p230 = por %p228, %p229
      %p231 = scmp.ne.s32.totalorder %s223, %s225
      %p232 = scmp.eq.s32.totalorder %s37, 1
      %p233 = por %p231, %p232
      %p234 = scmp.ne.s32.totalorder %s225, %s226
      %p235 = scmp.eq.s32.totalorder %s37, 0
      %p236 = por %p234, %p235
      %p237 = scmp.ne.s32.totalorder %s225, %s226
      %p238 = scmp.eq.s32.totalorder %s38, 1
      %p239 = por %p237, %p238
      %p241 = scmp.ne.s32.totalorder %s226, %s240
      %p242 = scmp.eq.s32.totalorder %s38, 0
      %p243 = por %p241, %p242
      %s245 = sadd.s32 %s244, 1
      %p248 = scmp.eq.s32.totalorder %s32, 1
      %p249 = scmp.ne.s32.totalorder %s244, %s246
      %p250 = scmp.eq.s32.totalorder %s32, 0
      %p251 = por %p249, %p250
      %p252 = scmp.ne.s32.totalorder %s244, %s246
      %p253 = scmp.eq.s32.totalorder %s37, 1
      %p254 = por %p252, %p253
      %p255 = scmp.ne.s32.totalorder %s246, %s247
      %p256 = scmp.eq.s32.totalorder %s37, 0
      %p257 = por %p255, %p256
      %p258 = scmp.ne.s32.totalorder %s246, %s247
      %p259 = scmp.eq.s32.totalorder %s38, 1
      %p260 = por %p258, %p259
      %p262 = scmp.ne.s32.totalorder %s247, %s261
      %p263 = scmp.eq.s32.totalorder %s38, 0
      %p264 = por %p262, %p263
      %s266 = sadd.s32 %s265, 1
      %p269 = scmp.eq.s32.totalorder %s32, 1
      %p270 = scmp.ne.s32.totalorder %s265, %s267
      %p271 = scmp.eq.s32.totalorder %s32, 0
      %p272 = por %p270, %p271
      %p273 = scmp.ne.s32.totalorder %s265, %s267
      %p274 = scmp.eq.s32.totalorder %s37, 1
      %p275 = por %p273, %p274
      %p276 = scmp.ne.s32.totalorder %s267, %s268
      %p277 = scmp.eq.s32.totalorder %s37, 0
      %p278 = por %p276, %p277
      %p279 = scmp.ne.s32.totalorder %s267, %s268
      %p280 = scmp.eq.s32.totalorder %s38, 1
      %p281 = por %p279, %p280
      %p283 = scmp.ne.s32.totalorder %s268, %s282
      %p284 = scmp.eq.s32.totalorder %s38, 0
      %p285 = por %p283, %p284
      %s287 = sadd.s32 %s286, 1
      %p290 = scmp.eq.s32.totalorder %s32, 1
      %p291 = scmp.ne.s32.totalorder %s286, %s288
      %p292 = scmp.eq.s32.totalorder %s32, 0
      %p293 = por %p291, %p292
      %p294 = scmp.ne.s32.totalorder %s286, %s288
      %p295 = scmp.eq.s32.totalorder %s37, 1
      %p296 = por %p294, %p295
      %p297 = scmp.ne.s32.totalorder %s288, %s289
      %p298 = scmp.eq.s32.totalorder %s37, 0
      %p299 = por %p297, %p298
      %p300 = scmp.ne.s32.totalorder %s288, %s289
      %p301 = scmp.eq.s32.totalorder %s38, 1
      %p302 = por %p300, %p301
      %p304 = scmp.ne.s32.totalorder %s289, %s303
      %p305 = scmp.eq.s32.totalorder %s38, 0
      %p306 = por %p304, %p305
      %s308 = sadd.s32 %s307, 1
      %p311 = scmp.eq.s32.totalorder %s32, 1
      %p312 = scmp.ne.s32.totalorder %s307, %s309
      %p313 = scmp.eq.s32.totalorder %s32, 0
      %p314 = por %p312, %p313
      %p315 = scmp.ne.s32.totalorder %s307, %s309
      %p316 = scmp.eq.s32.totalorder %s37, 1
      %p317 = por %p315, %p316
      %p318 = scmp.ne.s32.totalorder %s309, %s310
      %p319 = scmp.eq.s32.totalorder %s37, 0
      %p320 = por %p318, %p319
      %p321 = scmp.ne.s32.totalorder %s309, %s310
      %p322 = scmp.eq.s32.totalorder %s38, 1
      %p323 = por %p321, %p322
      %p325 = scmp.ne.s32.totalorder %s310, %s324
      %p326 = scmp.eq.s32.totalorder %s38, 0
      %p327 = por %p325, %p326
      %s328 = ssub.s32 %s32, %s39
      %p329 = scmp.eq.s32.totalorder %s328, 0
      %s331 = sadd.s32 %s330, 1
      %s332 = scalar_select %p329, %s330, %s331
      %p335 = pneg %p329
      %p336 = scmp.eq.s32.totalorder %s32, 1
      %p337 = por %p335, %p336
      %p338 = scmp.ne.s32.totalorder %s330, %s333
      %p339 = scmp.eq.s32.totalorder %s32, 0
      %p340 = por %p338, %p339
      %p341 = scmp.ne.s32.totalorder %s330, %s333
      %p342 = scmp.eq.s32.totalorder %s37, 1
      %p343 = por %p341, %p342
      %p344 = scmp.ne.s32.totalorder %s333, %s334
      %p345 = scmp.eq.s32.totalorder %s37, 0
      %p346 = por %p344, %p345
      %p347 = scmp.ne.s32.totalorder %s333, %s334
      %p348 = scmp.eq.s32.totalorder %s38, 1
      %p349 = por %p347, %p348
      %p351 = scmp.ne.s32.totalorder %s334, %s350
      %p352 = scmp.eq.s32.totalorder %s38, 0
      %p353 = por %p351, %p352
      %p354 = scmp.le.s32.totalorder 1, %s32
      %p355 = scmp.lt.s32.totalorder %s32, 3
      %p356 = pnand %p354, %p355
      %p357 = pneg %p356
      // Predicated region
      $region9: #{tpu_custom_call.1} parent=5 // pred_check
        _
      $region10: #{tpu_custom_call.1} parent=5 // pred_check_branch
        %359 = sbr.rel (%p356) target = $region12
      $region11: #{tpu_custom_call.1} parent=5 // pred_region
        %s360 = ssub.s32 %s32, 1
        // Predicated region
        $region13: #{tpu_custom_call.1} parent=11 // pred_check
          %p361 = pneg %p131
        $region14: #{tpu_custom_call.1} parent=11 // pred_check_branch
          %363 = sbr.rel (%p361) target = $region16
        $region15: #{tpu_custom_call.1} parent=11 // pred_region
          %365 = vsyncadd [#allocation9], 0
          %s366 = sshll.u32 %s3, 4
          %s367 = int_to_ptr.hbm [resolvable:$true] %s366
          %s368 = sshll.u32 [#allocation8], 4
          %s369 = int_to_ptr.vmem [resolvable:$true] %s368
          %374 = dma.hbm_to_vmem [thread:$0]  %s367, 256, %s369, [#allocation9], 64, 64, 4
        $region16: #{tpu_custom_call.1} parent=11 // pred_fallthru
          _
        // Predicated region
        $region17: #{tpu_custom_call.1} parent=11 // pred_check
          %p375 = pneg %p152
        $region18: #{tpu_custom_call.1} parent=11 // pred_check_branch
          %377 = sbr.rel (%p375) target = $region20
        $region19: #{tpu_custom_call.1} parent=11 // pred_region
          %379 = vsyncadd [#allocation9], 0
          %s380 = sshll.u32 %s4, 4
          %s381 = int_to_ptr.hbm [resolvable:$true] %s380
          %s382 = sshll.u32 [#allocation10], 4
          %s383 = int_to_ptr.vmem [resolvable:$true] %s382
          %388 = dma.hbm_to_vmem [thread:$0]  %s381, 256, %s383, [#allocation9], 64, 64, 4
        $region20: #{tpu_custom_call.1} parent=11 // pred_fallthru
          _
        // Predicated region
        $region21: #{tpu_custom_call.1} parent=11 // pred_check
          %p389 = pneg %p173
        $region22: #{tpu_custom_call.1} parent=11 // pred_check_branch
          %391 = sbr.rel (%p389) target = $region24
        $region23: #{tpu_custom_call.1} parent=11 // pred_region
          %393 = vsyncadd [#allocation12], 0
          %s394 = sshll.u32 %s5, 4
          %s395 = int_to_ptr.hbm [resolvable:$true] %s394
          %s396 = sshll.u32 [#allocation11], 4
          %s397 = int_to_ptr.vmem [resolvable:$true] %s396
          %402 = dma.hbm_to_vmem [thread:$0]  %s395, 256, %s397, [#allocation12], 64, 64, 4
        $region24: #{tpu_custom_call.1} parent=11 // pred_fallthru
          _
        // Predicated region
        $region25: #{tpu_custom_call.1} parent=11 // pred_check
          %p403 = pneg %p194
        $region26: #{tpu_custom_call.1} parent=11 // pred_check_branch
          %405 = sbr.rel (%p403) target = $region28
        $region27: #{tpu_custom_call.1} parent=11 // pred_region
          %407 = vsyncadd [#allocation12], 0
          %s409 = sshll.u32 %s6, 4
          %s410 = int_to_ptr.hbm [resolvable:$true] %s409
          %s411 = sshll.u32 [#allocation13], 4
          %s412 = int_to_ptr.vmem [resolvable:$true] %s411
          %414 = dma.hbm_to_vmem [thread:$0]  %s410, 16, %s412, [#allocation12]
        $region28: #{tpu_custom_call.1} parent=11 // pred_fallthru
          _
        // Predicated region
        $region29: #{tpu_custom_call.1} parent=11 // pred_check
          %p415 = pneg %p215
        $region30: #{tpu_custom_call.1} parent=11 // pred_check_branch
          %417 = sbr.rel (%p415) target = $region32
        $region31: #{tpu_custom_call.1} parent=11 // pred_region
          %419 = vsyncadd [#allocation15], 0
          %s420 = sshll.u32 %s7, 4
          %s421 = int_to_ptr.hbm [resolvable:$true] %s420
          %s422 = sshll.u32 [#allocation14], 4
          %s423 = int_to_ptr.vmem [resolvable:$true] %s422
          %428 = dma.hbm_to_vmem [thread:$0]  %s421, 256, %s423, [#allocation15], 64, 64, 4
        $region32: #{tpu_custom_call.1} parent=11 // pred_fallthru
          _
        // Predicated region
        $region33: #{tpu_custom_call.1} parent=11 // pred_check
          %p429 = pneg %p236
        $region34: #{tpu_custom_call.1} parent=11 // pred_check_branch
          %431 = sbr.rel (%p429) target = $region36
        $region35: #{tpu_custom_call.1} parent=11 // pred_region
          _
        $region36: #{tpu_custom_call.1} parent=11 // pred_fallthru
          _
        // Predicated region
        $region37: #{tpu_custom_call.1} parent=11 // pred_check
          %p432 = pneg %p257
        $region38: #{tpu_custom_call.1} parent=11 // pred_check_branch
          %434 = sbr.rel (%p432) target = $region40
        $region39: #{tpu_custom_call.1} parent=11 // pred_region
          %436 = vsyncadd [#allocation15], 0
          %s437 = sshll.u32 %s9, 4
          %s438 = int_to_ptr.hbm [resolvable:$true] %s437
          %s439 = sshll.u32 [#allocation16], 4
          %s440 = int_to_ptr.vmem [resolvable:$true] %s439
          %445 = dma.hbm_to_vmem [thread:$0]  %s438, 768, %s440, [#allocation15], 64, 64, 4
        $region40: #{tpu_custom_call.1} parent=11 // pred_fallthru
          _
        // Predicated region
        $region41: #{tpu_custom_call.1} parent=11 // pred_check
          %p446 = pneg %p278
        $region42: #{tpu_custom_call.1} parent=11 // pred_check_branch
          %448 = sbr.rel (%p446) target = $region44
        $region43: #{tpu_custom_call.1} parent=11 // pred_region
          _
        $region44: #{tpu_custom_call.1} parent=11 // pred_fallthru
          _
        // Predicated region
        $region45: #{tpu_custom_call.1} parent=11 // pred_check
          %p449 = pneg %p299
        $region46: #{tpu_custom_call.1} parent=11 // pred_check_branch
          %451 = sbr.rel (%p449) target = $region48
        $region47: #{tpu_custom_call.1} parent=11 // pred_region
          %453 = vsyncadd [#allocation18], 0
          %s454 = sshll.u32 %s11, 4
          %s455 = int_to_ptr.hbm [resolvable:$true] %s454
          %s456 = sshll.u32 [#allocation17], 4
          %s457 = int_to_ptr.vmem [resolvable:$true] %s456
          %462 = dma.hbm_to_vmem [thread:$0]  %s455, 768, %s457, [#allocation18], 64, 64, 4
        $region48: #{tpu_custom_call.1} parent=11 // pred_fallthru
          _
        // Predicated region
        $region49: #{tpu_custom_call.1} parent=11 // pred_check
          %p463 = pneg %p320
        $region50: #{tpu_custom_call.1} parent=11 // pred_check_branch
          %465 = sbr.rel (%p463) target = $region52
        $region51: #{tpu_custom_call.1} parent=11 // pred_region
          _
        $region52: #{tpu_custom_call.1} parent=11 // pred_fallthru
          _
      $region12: #{tpu_custom_call.1} parent=5 // pred_fallthru
        _
      %p466 = scmp.lt.s32.totalorder %s32, 2
      // Predicated region
      $region53: #{tpu_custom_call.1} parent=5 // pred_check
        %p467 = pneg %p466
      $region54: #{tpu_custom_call.1} parent=5 // pred_check_branch
        %469 = sbr.rel (%p467) target = $region56
      $region55: #{tpu_custom_call.1} parent=5 // pred_region
        // Predicated region
        $region57: #{tpu_custom_call.1} parent=55 // pred_check
          %p470 = pneg %p52
        $region58: #{tpu_custom_call.1} parent=55 // pred_check_branch
          %472 = sbr.rel (%p470) target = $region60
        $region59: #{tpu_custom_call.1} parent=55 // pred_region
          %s473 = sand.u32 %s42, 1
          %s474 = scalar_lea.sflag [#allocation3], %s473
          %s475 = sand.u32 %s42, 1
          %s476 = smul.addr %s475, 4
          %s477 = scalar_lea.vmem [#allocation2], %s476
          %479 = vsyncadd %s474, 0
          %s480 = smul.addr %s32, 4
          %s481 = scalar_lea.hbm %s0, %s480
          %s483 = sshll.u32 %s481, 4
          %s484 = int_to_ptr.hbm [resolvable:$true] %s483
          %s485 = sshll.u32 %s477, 4
          %s486 = int_to_ptr.vmem [resolvable:$true] %s485
          %488 = dma.hbm_to_vmem [thread:$0]  %s484, 64, %s486, %s474
        $region60: #{tpu_custom_call.1} parent=55 // pred_fallthru
          _
        // Predicated region
        $region61: #{tpu_custom_call.1} parent=55 // pred_check
          %p489 = pneg %p78
        $region62: #{tpu_custom_call.1} parent=55 // pred_check_branch
          %491 = sbr.rel (%p489) target = $region64
        $region63: #{tpu_custom_call.1} parent=55 // pred_region
          %s492 = sand.u32 %s32, 1
          %s493 = scalar_lea.sflag [#allocation6], %s492
          %s494 = sand.u32 %s68, 1
          %s495 = smul.addr %s494, 4
          %s496 = scalar_lea.vmem [#allocation5], %s495
          %498 = vsyncadd %s493, 0
          %s499 = smul.addr %s32, 4
          %s500 = scalar_lea.hbm %s1, %s499
          %s502 = sshll.u32 %s500, 4
          %s503 = int_to_ptr.hbm [resolvable:$true] %s502
          %s504 = sshll.u32 %s496, 4
          %s505 = int_to_ptr.vmem [resolvable:$true] %s504
          %507 = dma.hbm_to_vmem [thread:$0]  %s503, 64, %s505, %s493
        $region64: #{tpu_custom_call.1} parent=55 // pred_fallthru
          _
        // Predicated region
        $region65: #{tpu_custom_call.1} parent=55 // pred_check
          %p508 = pneg %p104
        $region66: #{tpu_custom_call.1} parent=55 // pred_check_branch
          %510 = sbr.rel (%p508) target = $region68
        $region67: #{tpu_custom_call.1} parent=55 // pred_region
          %s511 = sand.u32 %s32, 1
          %s512 = scalar_lea.sflag [#allocation6], %s511
          %s513 = sand.u32 %s94, 1
          %s514 = smul.addr %s513, 4
          %s515 = scalar_lea.vmem [#allocation7], %s514
          %517 = vsyncadd %s512, 0
          %s518 = smul.addr %s32, 4
          %s519 = scalar_lea.hbm %s2, %s518
          %s521 = sshll.u32 %s519, 4
          %s522 = int_to_ptr.hbm [resolvable:$true] %s521
          %s523 = sshll.u32 %s515, 4
          %s524 = int_to_ptr.vmem [resolvable:$true] %s523
          %526 = dma.hbm_to_vmem [thread:$0]  %s522, 64, %s524, %s512
        $region68: #{tpu_custom_call.1} parent=55 // pred_fallthru
          _
      $region56: #{tpu_custom_call.1} parent=5 // pred_fallthru
        _
      %p527 = scmp.le.s32.totalorder 1, %s32
      %p528 = scmp.lt.s32.totalorder %s32, 3
      %p529 = pnand %p527, %p528
      %p530 = pneg %p529
      // Predicated region
      $region69: #{tpu_custom_call.1} parent=5 // pred_check
        _
      $region70: #{tpu_custom_call.1} parent=5 // pred_check_branch
        %532 = sbr.rel (%p529) target = $region72
      $region71: #{tpu_custom_call.1} parent=5 // pred_region
        %s533 = ssub.s32 %s32, 1
        %s534 = sand.u32 %s45, 1
        %s535 = scalar_lea.sflag [#allocation3], %s534
        %s536 = sand.u32 %s45, 1
        %s537 = smul.addr %s536, 4
        %s538 = scalar_lea.vmem [#allocation2], %s537
        // Predicated region
        $region73: #{tpu_custom_call.1} parent=71 // pred_check
          %p539 = pneg %p58
        $region74: #{tpu_custom_call.1} parent=71 // pred_check_branch
          %541 = sbr.rel (%p539) target = $region76
        $region75: #{tpu_custom_call.1} parent=71 // pred_region
          %543 = dma.done %s535, 64
        $region76: #{tpu_custom_call.1} parent=71 // pred_fallthru
          _
        %s544 = sand.u32 %s37, 1
        %s545 = scalar_lea.sflag [#allocation6], %s544
        %s546 = sand.u32 %s71, 1
        %s547 = smul.addr %s546, 4
        %s548 = scalar_lea.vmem [#allocation5], %s547
        // Predicated region
        $region77: #{tpu_custom_call.1} parent=71 // pred_check
          %p549 = pneg %p84
        $region78: #{tpu_custom_call.1} parent=71 // pred_check_branch
          %551 = sbr.rel (%p549) target = $region80
        $region79: #{tpu_custom_call.1} parent=71 // pred_region
          %553 = dma.done %s545, 64
        $region80: #{tpu_custom_call.1} parent=71 // pred_fallthru
          _
        %s554 = sand.u32 %s37, 1
        %s555 = scalar_lea.sflag [#allocation6], %s554
        %s556 = sand.u32 %s97, 1
        %s557 = smul.addr %s556, 4
        %s558 = scalar_lea.vmem [#allocation7], %s557
        // Predicated region
        $region81: #{tpu_custom_call.1} parent=71 // pred_check
          %p559 = pneg %p110
        $region82: #{tpu_custom_call.1} parent=71 // pred_check_branch
          %561 = sbr.rel (%p559) target = $region84
        $region83: #{tpu_custom_call.1} parent=71 // pred_region
          %563 = dma.done %s555, 64
        $region84: #{tpu_custom_call.1} parent=71 // pred_fallthru
          _
        // Predicated region
        $region85: #{tpu_custom_call.1} parent=71 // pred_check
          %p564 = pneg %p131
        $region86: #{tpu_custom_call.1} parent=71 // pred_check_branch
          %566 = sbr.rel (%p564) target = $region88
        $region87: #{tpu_custom_call.1} parent=71 // pred_region
          %568 = dma.done [#allocation9], 256
        $region88: #{tpu_custom_call.1} parent=71 // pred_fallthru
          _
        // Predicated region
        $region89: #{tpu_custom_call.1} parent=71 // pred_check
          %p569 = pneg %p152
        $region90: #{tpu_custom_call.1} parent=71 // pred_check_branch
          %571 = sbr.rel (%p569) target = $region92
        $region91: #{tpu_custom_call.1} parent=71 // pred_region
          %573 = dma.done [#allocation9], 256
        $region92: #{tpu_custom_call.1} parent=71 // pred_fallthru
          _
        // Predicated region
        $region93: #{tpu_custom_call.1} parent=71 // pred_check
          %p574 = pneg %p173
        $region94: #{tpu_custom_call.1} parent=71 // pred_check_branch
          %576 = sbr.rel (%p574) target = $region96
        $region95: #{tpu_custom_call.1} parent=71 // pred_region
          %578 = dma.done [#allocation12], 256
        $region96: #{tpu_custom_call.1} parent=71 // pred_fallthru
          _
        // Predicated region
        $region97: #{tpu_custom_call.1} parent=71 // pred_check
          %p579 = pneg %p194
        $region98: #{tpu_custom_call.1} parent=71 // pred_check_branch
          %581 = sbr.rel (%p579) target = $region100
        $region99: #{tpu_custom_call.1} parent=71 // pred_region
          %583 = dma.done [#allocation12], 16
        $region100: #{tpu_custom_call.1} parent=71 // pred_fallthru
          _
        // Predicated region
        $region101: #{tpu_custom_call.1} parent=71 // pred_check
          %p584 = pneg %p215
        $region102: #{tpu_custom_call.1} parent=71 // pred_check_branch
          %586 = sbr.rel (%p584) target = $region104
        $region103: #{tpu_custom_call.1} parent=71 // pred_region
          %588 = dma.done [#allocation15], 256
        $region104: #{tpu_custom_call.1} parent=71 // pred_fallthru
          _
        // Predicated region
        $region105: #{tpu_custom_call.1} parent=71 // pred_check
          %p589 = pneg %p257
        $region106: #{tpu_custom_call.1} parent=71 // pred_check_branch
          %591 = sbr.rel (%p589) target = $region108
        $region107: #{tpu_custom_call.1} parent=71 // pred_region
          %593 = dma.done [#allocation15], 768
        $region108: #{tpu_custom_call.1} parent=71 // pred_fallthru
          _
        // Predicated region
        $region109: #{tpu_custom_call.1} parent=71 // pred_check
          %p594 = pneg %p299
        $region110: #{tpu_custom_call.1} parent=71 // pred_check_branch
          %596 = sbr.rel (%p594) target = $region112
        $region111: #{tpu_custom_call.1} parent=71 // pred_region
          %598 = dma.done [#allocation18], 768
        $region112: #{tpu_custom_call.1} parent=71 // pred_fallthru
          _
        %s599 = sand.u32 %s45, 1
        %s600 = scalar_lea.sflag [#allocation3], %s599
        %s601 = sand.u32 %s45, 1
        %s602 = smul.addr %s601, 4
        %s603 = scalar_lea.vmem [#allocation2], %s602
        %p604 = pneg %p58
        %p605 = pneg %p55
        %s606 = sand.u32 %s37, 1
        %s607 = scalar_lea.sflag [#allocation6], %s606
        %s608 = sand.u32 %s71, 1
        %s609 = smul.addr %s608, 4
        %s610 = scalar_lea.vmem [#allocation5], %s609
        %p611 = pneg %p84
        %p612 = pneg %p81
        %s613 = sand.u32 %s37, 1
        %s614 = scalar_lea.sflag [#allocation6], %s613
        %s615 = sand.u32 %s97, 1
        %s616 = smul.addr %s615, 4
        %s617 = scalar_lea.vmem [#allocation7], %s616
        %p618 = pneg %p110
        %p619 = pneg %p107
        %p620 = pneg %p131
        %p621 = pneg %p128
        %p622 = pneg %p152
        %p623 = pneg %p149
        %p624 = pneg %p173
        %p625 = pneg %p170
        %p626 = pneg %p194
        %p627 = pneg %p191
        %p628 = pneg %p215
        %p629 = pneg %p212
        %p630 = pneg %p236
        %p631 = pneg %p233
        %p632 = pneg %p257
        %p633 = pneg %p254
        %p634 = pneg %p278
        %p635 = pneg %p275
        %p636 = pneg %p299
        %p637 = pneg %p296
        %p638 = pneg %p320
        %p639 = pneg %p317
        %p640 = pneg %p346
        %p641 = pneg %p343
        %s642 = sand.u32 %s333, 1
        %s643 = scalar_lea.sflag [#allocation4], %s642
        %s644 = sand.u32 %s333, 1
        %s645 = smul.addr %s644, 24
        %s646 = scalar_lea.vmem [#allocation19], %s645
        %v648 = vld [vmem:[%s538] sm:$0xf]
        %v649 = vld [vmem:[%s548] sm:$0xf]
        %v650 = vld [vmem:[%s558] sm:$0xf]
        %v651 = vld [vmem:[#allocation8] sm:$0xf]
        %v652 = vld [vmem:[#allocation8 + $0x4] sm:$0xf]
        %v653 = vld [vmem:[#allocation8 + $0x8] sm:$0xf]
        %v654 = vld [vmem:[#allocation8 + $0xc] sm:$0xf]
        %v655 = vld [vmem:[#allocation10] sm:$0xf]
        %v656 = vld [vmem:[#allocation10 + $0x4] sm:$0xf]
        %v657 = vld [vmem:[#allocation10 + $0x8] sm:$0xf]
        %v658 = vld [vmem:[#allocation10 + $0xc] sm:$0xf]
        %v663 = vunpack.c.l.b16 %v655
        %v664 = vunpack.c.l.b16 %v656
        %v665 = vunpack.c.l.b16 %v657
        %v666 = vunpack.c.l.b16 %v658
        %v667 = vpack.c.b16 %v664, %v663
        %v668 = vpack.c.b16 %v666, %v665
        %vm671 = vcmask 261120
        %v673 = vsel %vm671, %v649, 0
        %675 = vmatpush.bf16.msra.mxu0 0
        %676 = vmatpush.bf16.msra.mxu0 0
        %677 = vmatpush.bf16.msra.mxu0 0
        %678 = vmatpush.bf16.msra.mxu0 0
        %679 = vmatpush.bf16.msra.mxu0 0
        %680 = vmatpush.bf16.msra.mxu0 0
        %681 = vmatpush.bf16.msra.mxu0 %v668
        %682 = vmatpush.bf16.msra.mxu0 %v667
        %683 = vmatmul.bf16.gmra.mxu0 %v673
        %v684 = vpop.f32.mrf.mxu0
        %v685 = vadd.f32 0.0, %v684
        %v686 = vpop.f32.mrf.mxu0
        %687 = vdwg.mxu0
        %v692 = vunpack.c.l.b16 %v651
        %v693 = vunpack.c.l.b16 %v652
        %v694 = vunpack.c.l.b16 %v653
        %v695 = vunpack.c.l.b16 %v654
        %v696 = vpack.c.b16 %v693, %v692
        %v697 = vpack.c.b16 %v695, %v694
        %v701 = vsel %vm671, %v648, 0
        %703 = vmatpush.bf16.msra.mxu0 0
        %704 = vmatpush.bf16.msra.mxu0 0
        %705 = vmatpush.bf16.msra.mxu0 0
        %706 = vmatpush.bf16.msra.mxu0 0
        %707 = vmatpush.bf16.msra.mxu0 0
        %708 = vmatpush.bf16.msra.mxu0 0
        %709 = vmatpush.bf16.msra.mxu0 %v697
        %710 = vmatpush.bf16.msra.mxu0 %v696
        %711 = vmatmul.bf16.gmra.mxu0 %v701
        %v712 = vpop.f32.mrf.mxu0
        %v713 = vadd.f32 %v685, %v712
        %v714 = vpop.f32.mrf.mxu0
        %715 = vdwg.mxu0
        %v716 = vld [vmem:[#allocation11] sm:$0xf]
        %v717 = vld [vmem:[#allocation11 + $0x4] sm:$0xf]
        %v718 = vld [vmem:[#allocation11 + $0x8] sm:$0xf]
        %v719 = vld [vmem:[#allocation11 + $0xc] sm:$0xf]
        %v724 = vunpack.c.l.b16 %v716
        %v725 = vunpack.c.l.b16 %v717
        %v726 = vunpack.c.l.b16 %v718
        %v727 = vunpack.c.l.b16 %v719
        %v728 = vpack.c.b16 %v725, %v724
        %v729 = vpack.c.b16 %v727, %v726
        %v733 = vsel %vm671, %v650, 0
        %735 = vmatpush.bf16.msra.mxu0 0
        %736 = vmatpush.bf16.msra.mxu0 0
        %737 = vmatpush.bf16.msra.mxu0 0
        %738 = vmatpush.bf16.msra.mxu0 0
        %739 = vmatpush.bf16.msra.mxu0 0
        %740 = vmatpush.bf16.msra.mxu0 0
        %741 = vmatpush.bf16.msra.mxu0 %v729
        %742 = vmatpush.bf16.msra.mxu0 %v728
        %743 = vmatmul.bf16.gmra.mxu0 %v733
        %v744 = vpop.f32.mrf.mxu0
        %v745 = vadd.f32 0.0, %v744
        %v746 = vpop.f32.mrf.mxu0
        %747 = vdwg.mxu0
        %v748 = vadd.f32 %v713, %v745
        %v749 = vld [vmem:[#allocation13] sm:$0x1]
        %v751 = vperm.slane %v749, 0
        %v753 = vadd.f32 %v748, %v751
        %v754 = vpack.c.bf16 %v753, %v753
        %v755 = vld [vmem:[#allocation14] sm:$0xf]
        %v756 = vld [vmem:[#allocation14 + $0x4] sm:$0xf]
        %v757 = vld [vmem:[#allocation14 + $0x8] sm:$0xf]
        %v758 = vld [vmem:[#allocation14 + $0xc] sm:$0xf]
        %v759 = vld [vmem:[%s8] sm:$0x1]
        %v761 = vperm.slane %v759, 0
        %v767 = vunpack.c.l.b16 %v755
        %v768 = vunpack.c.l.b16 %v756
        %v769 = vunpack.c.l.b16 %v757
        %v770 = vunpack.c.l.b16 %v758
        %v771 = vpack.c.b16 %v768, %v767
        %v772 = vpack.c.b16 %v770, %v769
        %v776 = vsel %vm671, %v754, 0
        %778 = vmatpush.bf16.msra.mxu0 0
        %779 = vmatpush.bf16.msra.mxu0 0
        %780 = vmatpush.bf16.msra.mxu0 0
        %781 = vmatpush.bf16.msra.mxu0 0
        %782 = vmatpush.bf16.msra.mxu0 0
        %783 = vmatpush.bf16.msra.mxu0 0
        %784 = vmatpush.bf16.msra.mxu0 %v772
        %785 = vmatpush.bf16.msra.mxu0 %v771
        %786 = vmatmul.bf16.gmra.mxu0 %v776
        %v787 = vpop.f32.mrf.mxu0
        %v788 = vadd.f32 %v761, %v787
        %v789 = vpop.f32.mrf.mxu0
        %790 = vdwg.mxu0
        %v791 = vld [vmem:[#allocation16] sm:$0xf]
        %v792 = vld [vmem:[#allocation16 + $0x4] sm:$0xf]
        %v793 = vld [vmem:[#allocation16 + $0x8] sm:$0xf]
        %v794 = vld [vmem:[#allocation16 + $0xc] sm:$0xf]
        %v795 = vld [vmem:[%s10] sm:$0x1]
        %v797 = vperm.slane %v795, 0
        %v803 = vunpack.c.l.b16 %v791
        %v804 = vunpack.c.l.b16 %v792
        %v805 = vunpack.c.l.b16 %v793
        %v806 = vunpack.c.l.b16 %v794
        %v807 = vpack.c.b16 %v804, %v803
        %v808 = vpack.c.b16 %v806, %v805
        %811 = vmatpush.bf16.msra.mxu0 0
        %812 = vmatpush.bf16.msra.mxu0 0
        %813 = vmatpush.bf16.msra.mxu0 0
        %814 = vmatpush.bf16.msra.mxu0 0
        %815 = vmatpush.bf16.msra.mxu0 0
        %816 = vmatpush.bf16.msra.mxu0 0
        %817 = vmatpush.bf16.msra.mxu0 %v808
        %818 = vmatpush.bf16.msra.mxu0 %v807
        %819 = vmatmul.bf16.gmra.mxu0 %v701
        %v820 = vpop.f32.mrf.mxu0
        %v821 = vadd.f32 %v797, %v820
        %v822 = vpop.f32.mrf.mxu0
        %823 = vdwg.mxu0
        %v824 = vpack.c.bf16 %v788, %v788
        %v825 = vpack.c.bf16 %v821, %v821
        %827 = vrot.lane.b32.xlu0 %v824, 120
        %v828 = vpop.permute.xlu0 %827
        %829 = vrot.lane.b32.xlu0 %v824, 112
        %v830 = vpop.permute.xlu0 %829
        %831 = vrot.lane.b32.xlu0 %v824, 104
        %v832 = vpop.permute.xlu0 %831
        %834 = vrot.lane.b32.xlu0 %v825, 120
        %v835 = vpop.permute.xlu0 %834
        %837 = vrot.lane.b32.xlu0 %v825, 112
        %v838 = vpop.permute.xlu0 %837
        %840 = vrot.lane.b32.xlu0 %v825, 104
        %v841 = vpop.permute.xlu0 %840
        %843 = vxpose.xlu0.c.b16.start [1/8] %v825, 128
        %844 = vxpose.xlu0.c.b16.cont [2/8] 0, 128
        %845 = vxpose.xlu0.c.b16.cont [3/8] 0, 128
        %846 = vxpose.xlu0.c.b16.cont [4/8] 0, 128
        %847 = vxpose.xlu0.c.b16.cont [5/8] 0, 128
        %848 = vxpose.xlu0.c.b16.cont [6/8] 0, 128
        %849 = vxpose.xlu0.c.b16.cont [7/8] 0, 128
        %850 = vxpose.xlu0.c.b16.end [8/8] 0, 128
        %v851 = vpop.trf.xlu0
        %v852 = vpop.trf.xlu0
        %v853 = vpop.trf.xlu0
        %v854 = vpop.trf.xlu0
        %v855 = vpop.trf.xlu0
        %v856 = vpop.trf.xlu0
        %v857 = vpop.trf.xlu0
        %v858 = vpop.trf.xlu0
        %859 = vxpose.xlu0.c.b16.start [1/8] %v835, 128
        %860 = vxpose.xlu0.c.b16.cont [2/8] 0, 128
        %861 = vxpose.xlu0.c.b16.cont [3/8] 0, 128
        %862 = vxpose.xlu0.c.b16.cont [4/8] 0, 128
        %863 = vxpose.xlu0.c.b16.cont [5/8] 0, 128
        %864 = vxpose.xlu0.c.b16.cont [6/8] 0, 128
        %865 = vxpose.xlu0.c.b16.cont [7/8] 0, 128
        %866 = vxpose.xlu0.c.b16.end [8/8] 0, 128
        %v867 = vpop.trf.xlu0
        %v868 = vpop.trf.xlu0
        %v869 = vpop.trf.xlu0
        %v870 = vpop.trf.xlu0
        %v871 = vpop.trf.xlu0
        %v872 = vpop.trf.xlu0
        %v873 = vpop.trf.xlu0
        %v874 = vpop.trf.xlu0
        %875 = vxpose.xlu0.c.b16.start [1/8] %v838, 128
        %876 = vxpose.xlu0.c.b16.cont [2/8] 0, 128
        %877 = vxpose.xlu0.c.b16.cont [3/8] 0, 128
        %878 = vxpose.xlu0.c.b16.cont [4/8] 0, 128
        %879 = vxpose.xlu0.c.b16.cont [5/8] 0, 128
        %880 = vxpose.xlu0.c.b16.cont [6/8] 0, 128
        %881 = vxpose.xlu0.c.b16.cont [7/8] 0, 128
        %882 = vxpose.xlu0.c.b16.end [8/8] 0, 128
        %v883 = vpop.trf.xlu0
        %v884 = vpop.trf.xlu0
        %v885 = vpop.trf.xlu0
        %v886 = vpop.trf.xlu0
        %v887 = vpop.trf.xlu0
        %v888 = vpop.trf.xlu0
        %v889 = vpop.trf.xlu0
        %v890 = vpop.trf.xlu0
        %891 = vxpose.xlu0.c.b16.start [1/8] %v841, 128
        %892 = vxpose.xlu0.c.b16.cont [2/8] 0, 128
        %893 = vxpose.xlu0.c.b16.cont [3/8] 0, 128
        %894 = vxpose.xlu0.c.b16.cont [4/8] 0, 128
        %895 = vxpose.xlu0.c.b16.cont [5/8] 0, 128
        %896 = vxpose.xlu0.c.b16.cont [6/8] 0, 128
        %897 = vxpose.xlu0.c.b16.cont [7/8] 0, 128
        %898 = vxpose.xlu0.c.b16.end [8/8] 0, 128
        %v899 = vpop.trf.xlu0
        %v900 = vpop.trf.xlu0
        %v901 = vpop.trf.xlu0
        %v902 = vpop.trf.xlu0
        %v903 = vpop.trf.xlu0
        %v904 = vpop.trf.xlu0
        %v905 = vpop.trf.xlu0
        %v906 = vpop.trf.xlu0
        %vm907 = vcmask 64512
        %v909 = vsel %vm907, %v824, 0
        %vm911 = vcmask 1043456
        %v913 = vsel %vm911, %v851, 0
        %915 = vmatpush.bf16.msra.mxu0 0
        %916 = vmatpush.bf16.msra.mxu0 0
        %917 = vmatpush.bf16.msra.mxu0 0
        %918 = vmatpush.bf16.msra.mxu0 0
        %919 = vmatpush.bf16.msra.mxu0 0
        %920 = vmatpush.bf16.msra.mxu0 0
        %921 = vmatpush.bf16.msra.mxu0 0
        %922 = vmatpush.bf16.msra.mxu0 %v913
        %923 = vmatmul.bf16.gmra.mxu0 %v909
        %v924 = vpop.f32.mrf.mxu0
        %v925 = vadd.f32 0.0, %v924
        %v926 = vpop.f32.mrf.mxu0
        %927 = vdwg.mxu0
        %v929 = vsel %vm907, %v828, 0
        %v932 = vsel %vm911, %v867, 0
        %934 = vmatpush.bf16.msra.mxu0 0
        %935 = vmatpush.bf16.msra.mxu0 0
        %936 = vmatpush.bf16.msra.mxu0 0
        %937 = vmatpush.bf16.msra.mxu0 0
        %938 = vmatpush.bf16.msra.mxu0 0
        %939 = vmatpush.bf16.msra.mxu0 0
        %940 = vmatpush.bf16.msra.mxu0 0
        %941 = vmatpush.bf16.msra.mxu0 %v932
        %942 = vmatmul.bf16.gmra.mxu0 %v929
        %v943 = vpop.f32.mrf.mxu0
        %v944 = vadd.f32 0.0, %v943
        %v945 = vpop.f32.mrf.mxu0
        %946 = vdwg.mxu0
        %v948 = vsel %vm907, %v830, 0
        %v951 = vsel %vm911, %v883, 0
        %953 = vmatpush.bf16.msra.mxu0 0
        %954 = vmatpush.bf16.msra.mxu0 0
        %955 = vmatpush.bf16.msra.mxu0 0
        %956 = vmatpush.bf16.msra.mxu0 0
        %957 = vmatpush.bf16.msra.mxu0 0
        %958 = vmatpush.bf16.msra.mxu0 0
        %959 = vmatpush.bf16.msra.mxu0 0
        %960 = vmatpush.bf16.msra.mxu0 %v951
        %961 = vmatmul.bf16.gmra.mxu0 %v948
        %v962 = vpop.f32.mrf.mxu0
        %v963 = vadd.f32 0.0, %v962
        %v964 = vpop.f32.mrf.mxu0
        %965 = vdwg.mxu0
        %v967 = vsel %vm907, %v832, 0
        %v970 = vsel %vm911, %v899, 0
        %972 = vmatpush.bf16.msra.mxu0 0
        %973 = vmatpush.bf16.msra.mxu0 0
        %974 = vmatpush.bf16.msra.mxu0 0
        %975 = vmatpush.bf16.msra.mxu0 0
        %976 = vmatpush.bf16.msra.mxu0 0
        %977 = vmatpush.bf16.msra.mxu0 0
        %978 = vmatpush.bf16.msra.mxu0 0
        %979 = vmatpush.bf16.msra.mxu0 %v970
        %980 = vmatmul.bf16.gmra.mxu0 %v967
        %v981 = vpop.f32.mrf.mxu0
        %v982 = vadd.f32 0.0, %v981
        %v983 = vpop.f32.mrf.mxu0
        %984 = vdwg.mxu0
        %v985 = vsel %vm907, %v925, -inf
        %986 = vmax.xlane.f32.xlu0 %v985
        %v987 = vpop.xlane.xlu0 %986
        %v988 = vsel %vm907, %v944, -inf
        %989 = vmax.xlane.f32.xlu0 %v988
        %v990 = vpop.xlane.xlu0 %989
        %v991 = vsel %vm907, %v963, -inf
        %992 = vmax.xlane.f32.xlu0 %v991
        %v993 = vpop.xlane.xlu0 %992
        %v994 = vsel %vm907, %v982, -inf
        %995 = vmax.xlane.f32.xlu0 %v994
        %v996 = vpop.xlane.xlu0 %995
        %v997 = vsub.f32 %v925, %v987
        %v998 = vsub.f32 %v944, %v990
        %v999 = vsub.f32 %v963, %v993
        %v1000 = vsub.f32 %v982, %v996
        %v1001 = vmul.f32 %v997, 1.442695
        %v1002 = vpow.pop %v1001
        %v1003 = vmul.f32 %v998, 1.442695
        %v1004 = vpow.pop %v1003
        %v1005 = vmul.f32 %v999, 1.442695
        %v1006 = vpow.pop %v1005
        %v1007 = vmul.f32 %v1000, 1.442695
        %v1008 = vpow.pop %v1007
        %v1009 = vsel %vm907, %v1002, 0.0
        %1010 = vadd.xlane.f32.xlu0 %v1009
        %v1011 = vpop.xlane.xlu0 %1010
        %v1012 = vsel %vm907, %v1004, 0.0
        %1013 = vadd.xlane.f32.xlu0 %v1012
        %v1014 = vpop.xlane.xlu0 %1013
        %v1015 = vsel %vm907, %v1006, 0.0
        %1016 = vadd.xlane.f32.xlu0 %v1015
        %v1017 = vpop.xlane.xlu0 %1016
        %v1018 = vsel %vm907, %v1008, 0.0
        %1019 = vadd.xlane.f32.xlu0 %v1018
        %v1020 = vpop.xlane.xlu0 %1019
        %v1021 = vrcp.pop %v1011
        %v1022 = vrcp.pop %v1014
        %v1023 = vrcp.pop %v1017
        %v1024 = vrcp.pop %v1020
        %v1025 = vmul.f32 %v1002, %v1021
        %v1026 = vmul.f32 %v1004, %v1022
        %v1027 = vmul.f32 %v1006, %v1023
        %v1028 = vmul.f32 %v1008, %v1024
        %v1029 = vpack.c.bf16 %v1025, %v1025
        %v1030 = vpack.c.bf16 %v1026, %v1026
        %v1031 = vpack.c.bf16 %v1027, %v1027
        %v1032 = vpack.c.bf16 %v1028, %v1028
        %v1033 = vunpack.c.l.b16 %v825
        %v1034 = vpack.c.b16 %v1033, %v1033
        %1035 = vrot.lane.b32.xlu0 %v1034, 96
        %v1036 = vpop.permute.xlu0 %1035
        %v1038 = vsel %vm907, %v1029, 0
        %v1041 = vsel %vm911, %v1036, 0
        %1043 = vmatpush.bf16.msra.mxu0 0
        %1044 = vmatpush.bf16.msra.mxu0 0
        %1045 = vmatpush.bf16.msra.mxu0 0
        %1046 = vmatpush.bf16.msra.mxu0 0
        %1047 = vmatpush.bf16.msra.mxu0 0
        %1048 = vmatpush.bf16.msra.mxu0 0
        %1049 = vmatpush.bf16.msra.mxu0 0
        %1050 = vmatpush.bf16.msra.mxu0 %v1041
        %1051 = vmatmul.bf16.gmra.mxu0 %v1038
        %v1052 = vpop.f32.mrf.mxu0
        %v1053 = vadd.f32 0.0, %v1052
        %v1054 = vpop.f32.mrf.mxu0
        %1055 = vdwg.mxu0
        %v1056 = vunpack.c.l.b16 %v835
        %v1057 = vpack.c.b16 %v1056, %v1056
        %1058 = vrot.lane.b32.xlu0 %v1057, 96
        %v1059 = vpop.permute.xlu0 %1058
        %v1061 = vsel %vm907, %v1030, 0
        %v1064 = vsel %vm911, %v1059, 0
        %1066 = vmatpush.bf16.msra.mxu0 0
        %1067 = vmatpush.bf16.msra.mxu0 0
        %1068 = vmatpush.bf16.msra.mxu0 0
        %1069 = vmatpush.bf16.msra.mxu0 0
        %1070 = vmatpush.bf16.msra.mxu0 0
        %1071 = vmatpush.bf16.msra.mxu0 0
        %1072 = vmatpush.bf16.msra.mxu0 0
        %1073 = vmatpush.bf16.msra.mxu0 %v1064
        %1074 = vmatmul.bf16.gmra.mxu0 %v1061
        %v1075 = vpop.f32.mrf.mxu0
        %v1076 = vadd.f32 0.0, %v1075
        %v1077 = vpop.f32.mrf.mxu0
        %1078 = vdwg.mxu0
        %v1079 = vunpack.c.l.b16 %v838
        %v1080 = vpack.c.b16 %v1079, %v1079
        %1081 = vrot.lane.b32.xlu0 %v1080, 96
        %v1082 = vpop.permute.xlu0 %1081
        %v1084 = vsel %vm907, %v1031, 0
        %v1087 = vsel %vm911, %v1082, 0
        %1089 = vmatpush.bf16.msra.mxu0 0
        %1090 = vmatpush.bf16.msra.mxu0 0
        %1091 = vmatpush.bf16.msra.mxu0 0
        %1092 = vmatpush.bf16.msra.mxu0 0
        %1093 = vmatpush.bf16.msra.mxu0 0
        %1094 = vmatpush.bf16.msra.mxu0 0
        %1095 = vmatpush.bf16.msra.mxu0 0
        %1096 = vmatpush.bf16.msra.mxu0 %v1087
        %1097 = vmatmul.bf16.gmra.mxu0 %v1084
        %v1098 = vpop.f32.mrf.mxu0
        %v1099 = vadd.f32 0.0, %v1098
        %v1100 = vpop.f32.mrf.mxu0
        %1101 = vdwg.mxu0
        %v1102 = vunpack.c.l.b16 %v841
        %v1103 = vpack.c.b16 %v1102, %v1102
        %1104 = vrot.lane.b32.xlu0 %v1103, 96
        %v1105 = vpop.permute.xlu0 %1104
        %v1107 = vsel %vm907, %v1032, 0
        %v1110 = vsel %vm911, %v1105, 0
        %1112 = vmatpush.bf16.msra.mxu0 0
        %1113 = vmatpush.bf16.msra.mxu0 0
        %1114 = vmatpush.bf16.msra.mxu0 0
        %1115 = vmatpush.bf16.msra.mxu0 0
        %1116 = vmatpush.bf16.msra.mxu0 0
        %1117 = vmatpush.bf16.msra.mxu0 0
        %1118 = vmatpush.bf16.msra.mxu0 0
        %1119 = vmatpush.bf16.msra.mxu0 %v1110
        %1120 = vmatmul.bf16.gmra.mxu0 %v1107
        %v1121 = vpop.f32.mrf.mxu0
        %v1122 = vadd.f32 0.0, %v1121
        %v1123 = vpop.f32.mrf.mxu0
        %1124 = vdwg.mxu0
        %v1125 = vpack.c.bf16 %v1053, %v1053
        %v1126 = vld [vmem:[#allocation17] sm:$0xf]
        %v1127 = vpack.c.bf16 %v1076, %v1076
        %s1128 = scalar_lea.vmem [#allocation17], 4
        %v1129 = vld [vmem:[%s1128] sm:$0xf]
        %v1131 = vsel %vm907, %v1127, 0
        %v1134 = vsel %vm911, %v1129, 0
        %1136 = vmatpush.bf16.msra.mxu0 0
        %1137 = vmatpush.bf16.msra.mxu0 0
        %1138 = vmatpush.bf16.msra.mxu0 0
        %1139 = vmatpush.bf16.msra.mxu0 0
        %1140 = vmatpush.bf16.msra.mxu0 0
        %1141 = vmatpush.bf16.msra.mxu0 0
        %1142 = vmatpush.bf16.msra.mxu0 0
        %1143 = vmatpush.bf16.msra.mxu0 %v1134
        %1144 = vmatmul.bf16.gmra.mxu0 %v1131
        %v1145 = vpop.f32.mrf.mxu0
        %v1146 = vadd.f32 0.0, %v1145
        %v1147 = vpop.f32.mrf.mxu0
        %1148 = vdwg.mxu0
        %v1150 = vsel %vm907, %v1125, 0
        %v1153 = vsel %vm911, %v1126, 0
        %1155 = vmatpush.bf16.msra.mxu0 0
        %1156 = vmatpush.bf16.msra.mxu0 0
        %1157 = vmatpush.bf16.msra.mxu0 0
        %1158 = vmatpush.bf16.msra.mxu0 0
        %1159 = vmatpush.bf16.msra.mxu0 0
        %1160 = vmatpush.bf16.msra.mxu0 0
        %1161 = vmatpush.bf16.msra.mxu0 0
        %1162 = vmatpush.bf16.msra.mxu0 %v1153
        %1163 = vmatmul.bf16.gmra.mxu0 %v1150
        %v1164 = vpop.f32.mrf.mxu0
        %v1165 = vadd.f32 %v1146, %v1164
        %v1166 = vpop.f32.mrf.mxu0
        %1167 = vdwg.mxu0
        %v1168 = vpack.c.bf16 %v1099, %v1099
        %s1169 = scalar_lea.vmem [#allocation17], 8
        %v1170 = vld [vmem:[%s1169] sm:$0xf]
        %v1172 = vsel %vm907, %v1168, 0
        %v1175 = vsel %vm911, %v1170, 0
        %1177 = vmatpush.bf16.msra.mxu0 0
        %1178 = vmatpush.bf16.msra.mxu0 0
        %1179 = vmatpush.bf16.msra.mxu0 0
        %1180 = vmatpush.bf16.msra.mxu0 0
        %1181 = vmatpush.bf16.msra.mxu0 0
        %1182 = vmatpush.bf16.msra.mxu0 0
        %1183 = vmatpush.bf16.msra.mxu0 0
        %1184 = vmatpush.bf16.msra.mxu0 %v1175
        %1185 = vmatmul.bf16.gmra.mxu0 %v1172
        %v1186 = vpop.f32.mrf.mxu0
        %v1187 = vadd.f32 0.0, %v1186
        %v1188 = vpop.f32.mrf.mxu0
        %1189 = vdwg.mxu0
        %v1190 = vadd.f32 %v1165, %v1187
        %v1191 = vpack.c.bf16 %v1122, %v1122
        %s1192 = scalar_lea.vmem [#allocation17], 12
        %v1193 = vld [vmem:[%s1192] sm:$0xf]
        %v1195 = vsel %vm907, %v1191, 0
        %v1198 = vsel %vm911, %v1193, 0
        %1200 = vmatpush.bf16.msra.mxu0 0
        %1201 = vmatpush.bf16.msra.mxu0 0
        %1202 = vmatpush.bf16.msra.mxu0 0
        %1203 = vmatpush.bf16.msra.mxu0 0
        %1204 = vmatpush.bf16.msra.mxu0 0
        %1205 = vmatpush.bf16.msra.mxu0 0
        %1206 = vmatpush.bf16.msra.mxu0 0
        %1207 = vmatpush.bf16.msra.mxu0 %v1198
        %1208 = vmatmul.bf16.gmra.mxu0 %v1195
        %v1209 = vpop.f32.mrf.mxu0
        %v1210 = vadd.f32 0.0, %v1209
        %v1211 = vpop.f32.mrf.mxu0
        %1212 = vdwg.mxu0
        %v1213 = vadd.f32 %v1190, %v1210
        %v1214 = vld [vmem:[%s12] sm:$0x1]
        %v1216 = vperm.slane %v1214, 0
        %v1218 = vadd.f32 %v1213, %v1216
        %1219 = vst.msk [vmem:[%s646] sm:$0xff] %vm671, %v1218
        %s1220 = scalar_lea.vmem [#allocation16], 16
        %v1221 = vld [vmem:[%s1220] sm:$0xf]
        %v1222 = vld [vmem:[%s1220 + $0x4] sm:$0xf]
        %v1223 = vld [vmem:[%s1220 + $0x8] sm:$0xf]
        %v1224 = vld [vmem:[%s1220 + $0xc] sm:$0xf]
        %s1225 = scalar_lea.vmem %s10, 1
        %v1226 = vld [vmem:[%s1225] sm:$0x1]
        %v1228 = vperm.slane %v1226, 0
        %v1234 = vunpack.c.l.b16 %v1221
        %v1235 = vunpack.c.l.b16 %v1222
        %v1236 = vunpack.c.l.b16 %v1223
        %v1237 = vunpack.c.l.b16 %v1224
        %v1238 = vpack.c.b16 %v1235, %v1234
        %v1239 = vpack.c.b16 %v1237, %v1236
        %1242 = vmatpush.bf16.msra.mxu0 0
        %1243 = vmatpush.bf16.msra.mxu0 0
        %1244 = vmatpush.bf16.msra.mxu0 0
        %1245 = vmatpush.bf16.msra.mxu0 0
        %1246 = vmatpush.bf16.msra.mxu0 0
        %1247 = vmatpush.bf16.msra.mxu0 0
        %1248 = vmatpush.bf16.msra.mxu0 %v1239
        %1249 = vmatpush.bf16.msra.mxu0 %v1238
        %1250 = vmatmul.bf16.gmra.mxu0 %v673
        %v1251 = vpop.f32.mrf.mxu0
        %v1252 = vadd.f32 %v1228, %v1251
        %v1253 = vpop.f32.mrf.mxu0
        %1254 = vdwg.mxu0
        %v1255 = vpack.c.bf16 %v1252, %v1252
        %1257 = vrot.lane.b32.xlu0 %v1255, 120
        %v1258 = vpop.permute.xlu0 %1257
        %1260 = vrot.lane.b32.xlu0 %v1255, 112
        %v1261 = vpop.permute.xlu0 %1260
        %1263 = vrot.lane.b32.xlu0 %v1255, 104
        %v1264 = vpop.permute.xlu0 %1263
        %1266 = vxpose.xlu0.c.b16.start [1/8] %v1255, 128
        %1267 = vxpose.xlu0.c.b16.cont [2/8] 0, 128
        %1268 = vxpose.xlu0.c.b16.cont [3/8] 0, 128
        %1269 = vxpose.xlu0.c.b16.cont [4/8] 0, 128
        %1270 = vxpose.xlu0.c.b16.cont [5/8] 0, 128
        %1271 = vxpose.xlu0.c.b16.cont [6/8] 0, 128
        %1272 = vxpose.xlu0.c.b16.cont [7/8] 0, 128
        %1273 = vxpose.xlu0.c.b16.end [8/8] 0, 128
        %v1274 = vpop.trf.xlu0
        %v1275 = vpop.trf.xlu0
        %v1276 = vpop.trf.xlu0
        %v1277 = vpop.trf.xlu0
        %v1278 = vpop.trf.xlu0
        %v1279 = vpop.trf.xlu0
        %v1280 = vpop.trf.xlu0
        %v1281 = vpop.trf.xlu0
        %1282 = vxpose.xlu0.c.b16.start [1/8] %v1258, 128
        %1283 = vxpose.xlu0.c.b16.cont [2/8] 0, 128
        %1284 = vxpose.xlu0.c.b16.cont [3/8] 0, 128
        %1285 = vxpose.xlu0.c.b16.cont [4/8] 0, 128
        %1286 = vxpose.xlu0.c.b16.cont [5/8] 0, 128
        %1287 = vxpose.xlu0.c.b16.cont [6/8] 0, 128
        %1288 = vxpose.xlu0.c.b16.cont [7/8] 0, 128
        %1289 = vxpose.xlu0.c.b16.end [8/8] 0, 128
        %v1290 = vpop.trf.xlu0
        %v1291 = vpop.trf.xlu0
        %v1292 = vpop.trf.xlu0
        %v1293 = vpop.trf.xlu0
        %v1294 = vpop.trf.xlu0
        %v1295 = vpop.trf.xlu0
        %v1296 = vpop.trf.xlu0
        %v1297 = vpop.trf.xlu0
        %1298 = vxpose.xlu0.c.b16.start [1/8] %v1261, 128
        %1299 = vxpose.xlu0.c.b16.cont [2/8] 0, 128
        %1300 = vxpose.xlu0.c.b16.cont [3/8] 0, 128
        %1301 = vxpose.xlu0.c.b16.cont [4/8] 0, 128
        %1302 = vxpose.xlu0.c.b16.cont [5/8] 0, 128
        %1303 = vxpose.xlu0.c.b16.cont [6/8] 0, 128
        %1304 = vxpose.xlu0.c.b16.cont [7/8] 0, 128
        %1305 = vxpose.xlu0.c.b16.end [8/8] 0, 128
        %v1306 = vpop.trf.xlu0
        %v1307 = vpop.trf.xlu0
        %v1308 = vpop.trf.xlu0
        %v1309 = vpop.trf.xlu0
        %v1310 = vpop.trf.xlu0
        %v1311 = vpop.trf.xlu0
        %v1312 = vpop.trf.xlu0
        %v1313 = vpop.trf.xlu0
        %1314 = vxpose.xlu0.c.b16.start [1/8] %v1264, 128
        %1315 = vxpose.xlu0.c.b16.cont [2/8] 0, 128
        %1316 = vxpose.xlu0.c.b16.cont [3/8] 0, 128
        %1317 = vxpose.xlu0.c.b16.cont [4/8] 0, 128
        %1318 = vxpose.xlu0.c.b16.cont [5/8] 0, 128
        %1319 = vxpose.xlu0.c.b16.cont [6/8] 0, 128
        %1320 = vxpose.xlu0.c.b16.cont [7/8] 0, 128
        %1321 = vxpose.xlu0.c.b16.end [8/8] 0, 128
        %v1322 = vpop.trf.xlu0
        %v1323 = vpop.trf.xlu0
        %v1324 = vpop.trf.xlu0
        %v1325 = vpop.trf.xlu0
        %v1326 = vpop.trf.xlu0
        %v1327 = vpop.trf.xlu0
        %v1328 = vpop.trf.xlu0
        %v1329 = vpop.trf.xlu0
        %v1330 = vunpack.c.l.b16 %v824
        %v1331 = vpack.c.b16 %v1330, %v1330
        %1332 = vrot.lane.b32.xlu0 %v1331, 96
        %v1333 = vpop.permute.xlu0 %1332
        %v1335 = vsel %vm907, %v1333, 0
        %v1338 = vsel %vm911, %v1274, 0
        %1340 = vmatpush.bf16.msra.mxu0 0
        %1341 = vmatpush.bf16.msra.mxu0 0
        %1342 = vmatpush.bf16.msra.mxu0 0
        %1343 = vmatpush.bf16.msra.mxu0 0
        %1344 = vmatpush.bf16.msra.mxu0 0
        %1345 = vmatpush.bf16.msra.mxu0 0
        %1346 = vmatpush.bf16.msra.mxu0 0
        %1347 = vmatpush.bf16.msra.mxu0 %v1338
        %1348 = vmatmul.bf16.gmra.mxu0 %v1335
        %v1349 = vpop.f32.mrf.mxu0
        %v1350 = vadd.f32 0.0, %v1349
        %v1351 = vpop.f32.mrf.mxu0
        %1352 = vdwg.mxu0
        %v1353 = vunpack.c.l.b16 %v828
        %v1354 = vpack.c.b16 %v1353, %v1353
        %1355 = vrot.lane.b32.xlu0 %v1354, 96
        %v1356 = vpop.permute.xlu0 %1355
        %v1358 = vsel %vm907, %v1356, 0
        %v1361 = vsel %vm911, %v1290, 0
        %1363 = vmatpush.bf16.msra.mxu0 0
        %1364 = vmatpush.bf16.msra.mxu0 0
        %1365 = vmatpush.bf16.msra.mxu0 0
        %1366 = vmatpush.bf16.msra.mxu0 0
        %1367 = vmatpush.bf16.msra.mxu0 0
        %1368 = vmatpush.bf16.msra.mxu0 0
        %1369 = vmatpush.bf16.msra.mxu0 0
        %1370 = vmatpush.bf16.msra.mxu0 %v1361
        %1371 = vmatmul.bf16.gmra.mxu0 %v1358
        %v1372 = vpop.f32.mrf.mxu0
        %v1373 = vadd.f32 0.0, %v1372
        %v1374 = vpop.f32.mrf.mxu0
        %1375 = vdwg.mxu0
        %v1376 = vunpack.c.l.b16 %v830
        %v1377 = vpack.c.b16 %v1376, %v1376
        %1378 = vrot.lane.b32.xlu0 %v1377, 96
        %v1379 = vpop.permute.xlu0 %1378
        %v1381 = vsel %vm907, %v1379, 0
        %v1384 = vsel %vm911, %v1306, 0
        %1386 = vmatpush.bf16.msra.mxu0 0
        %1387 = vmatpush.bf16.msra.mxu0 0
        %1388 = vmatpush.bf16.msra.mxu0 0
        %1389 = vmatpush.bf16.msra.mxu0 0
        %1390 = vmatpush.bf16.msra.mxu0 0
        %1391 = vmatpush.bf16.msra.mxu0 0
        %1392 = vmatpush.bf16.msra.mxu0 0
        %1393 = vmatpush.bf16.msra.mxu0 %v1384
        %1394 = vmatmul.bf16.gmra.mxu0 %v1381
        %v1395 = vpop.f32.mrf.mxu0
        %v1396 = vadd.f32 0.0, %v1395
        %v1397 = vpop.f32.mrf.mxu0
        %1398 = vdwg.mxu0
        %v1399 = vunpack.c.l.b16 %v832
        %v1400 = vpack.c.b16 %v1399, %v1399
        %1401 = vrot.lane.b32.xlu0 %v1400, 96
        %v1402 = vpop.permute.xlu0 %1401
        %v1404 = vsel %vm907, %v1402, 0
        %v1407 = vsel %vm911, %v1322, 0
        %1409 = vmatpush.bf16.msra.mxu0 0
        %1410 = vmatpush.bf16.msra.mxu0 0
        %1411 = vmatpush.bf16.msra.mxu0 0
        %1412 = vmatpush.bf16.msra.mxu0 0
        %1413 = vmatpush.bf16.msra.mxu0 0
        %1414 = vmatpush.bf16.msra.mxu0 0
        %1415 = vmatpush.bf16.msra.mxu0 0
        %1416 = vmatpush.bf16.msra.mxu0 %v1407
        %1417 = vmatmul.bf16.gmra.mxu0 %v1404
        %v1418 = vpop.f32.mrf.mxu0
        %v1419 = vadd.f32 0.0, %v1418
        %v1420 = vpop.f32.mrf.mxu0
        %1421 = vdwg.mxu0
        %v1422 = vsel %vm907, %v1350, -inf
        %1423 = vmax.xlane.f32.xlu0 %v1422
        %v1424 = vpop.xlane.xlu0 %1423
        %v1425 = vsel %vm907, %v1373, -inf
        %1426 = vmax.xlane.f32.xlu0 %v1425
        %v1427 = vpop.xlane.xlu0 %1426
        %v1428 = vsel %vm907, %v1396, -inf
        %1429 = vmax.xlane.f32.xlu0 %v1428
        %v1430 = vpop.xlane.xlu0 %1429
        %v1431 = vsel %vm907, %v1419, -inf
        %1432 = vmax.xlane.f32.xlu0 %v1431
        %v1433 = vpop.xlane.xlu0 %1432
        %v1434 = vsub.f32 %v1350, %v1424
        %v1435 = vsub.f32 %v1373, %v1427
        %v1436 = vsub.f32 %v1396, %v1430
        %v1437 = vsub.f32 %v1419, %v1433
        %v1438 = vmul.f32 %v1434, 1.442695
        %v1439 = vpow.pop %v1438
        %v1440 = vmul.f32 %v1435, 1.442695
        %v1441 = vpow.pop %v1440
        %v1442 = vmul.f32 %v1436, 1.442695
        %v1443 = vpow.pop %v1442
        %v1444 = vmul.f32 %v1437, 1.442695
        %v1445 = vpow.pop %v1444
        %v1446 = vsel %vm907, %v1439, 0.0
        %1447 = vadd.xlane.f32.xlu0 %v1446
        %v1448 = vpop.xlane.xlu0 %1447
        %v1449 = vsel %vm907, %v1441, 0.0
        %1450 = vadd.xlane.f32.xlu0 %v1449
        %v1451 = vpop.xlane.xlu0 %1450
        %v1452 = vsel %vm907, %v1443, 0.0
        %1453 = vadd.xlane.f32.xlu0 %v1452
        %v1454 = vpop.xlane.xlu0 %1453
        %v1455 = vsel %vm907, %v1445, 0.0
        %1456 = vadd.xlane.f32.xlu0 %v1455
        %v1457 = vpop.xlane.xlu0 %1456
        %v1458 = vrcp.pop %v1448
        %v1459 = vrcp.pop %v1451
        %v1460 = vrcp.pop %v1454
        %v1461 = vrcp.pop %v1457
        %v1462 = vmul.f32 %v1439, %v1458
        %v1463 = vmul.f32 %v1441, %v1459
        %v1464 = vmul.f32 %v1443, %v1460
        %v1465 = vmul.f32 %v1445, %v1461
        %v1466 = vpack.c.bf16 %v1462, %v1462
        %v1467 = vpack.c.bf16 %v1463, %v1463
        %v1468 = vpack.c.bf16 %v1464, %v1464
        %v1469 = vpack.c.bf16 %v1465, %v1465
        %v1470 = vunpack.c.l.b16 %v1255
        %v1471 = vpack.c.b16 %v1470, %v1470
        %1472 = vrot.lane.b32.xlu0 %v1471, 96
        %v1473 = vpop.permute.xlu0 %1472
        %v1475 = vsel %vm907, %v1466, 0
        %v1478 = vsel %vm911, %v1473, 0
        %1480 = vmatpush.bf16.msra.mxu0 0
        %1481 = vmatpush.bf16.msra.mxu0 0
        %1482 = vmatpush.bf16.msra.mxu0 0
        %1483 = vmatpush.bf16.msra.mxu0 0
        %1484 = vmatpush.bf16.msra.mxu0 0
        %1485 = vmatpush.bf16.msra.mxu0 0
        %1486 = vmatpush.bf16.msra.mxu0 0
        %1487 = vmatpush.bf16.msra.mxu0 %v1478
        %1488 = vmatmul.bf16.gmra.mxu0 %v1475
        %v1489 = vpop.f32.mrf.mxu0
        %v1490 = vadd.f32 0.0, %v1489
        %v1491 = vpop.f32.mrf.mxu0
        %1492 = vdwg.mxu0
        %v1493 = vunpack.c.l.b16 %v1258
        %v1494 = vpack.c.b16 %v1493, %v1493
        %1495 = vrot.lane.b32.xlu0 %v1494, 96
        %v1496 = vpop.permute.xlu0 %1495
        %v1498 = vsel %vm907, %v1467, 0
        %v1501 = vsel %vm911, %v1496, 0
        %1503 = vmatpush.bf16.msra.mxu0 0
        %1504 = vmatpush.bf16.msra.mxu0 0
        %1505 = vmatpush.bf16.msra.mxu0 0
        %1506 = vmatpush.bf16.msra.mxu0 0
        %1507 = vmatpush.bf16.msra.mxu0 0
        %1508 = vmatpush.bf16.msra.mxu0 0
        %1509 = vmatpush.bf16.msra.mxu0 0
        %1510 = vmatpush.bf16.msra.mxu0 %v1501
        %1511 = vmatmul.bf16.gmra.mxu0 %v1498
        %v1512 = vpop.f32.mrf.mxu0
        %v1513 = vadd.f32 0.0, %v1512
        %v1514 = vpop.f32.mrf.mxu0
        %1515 = vdwg.mxu0
        %v1516 = vunpack.c.l.b16 %v1261
        %v1517 = vpack.c.b16 %v1516, %v1516
        %1518 = vrot.lane.b32.xlu0 %v1517, 96
        %v1519 = vpop.permute.xlu0 %1518
        %v1521 = vsel %vm907, %v1468, 0
        %v1524 = vsel %vm911, %v1519, 0
        %1526 = vmatpush.bf16.msra.mxu0 0
        %1527 = vmatpush.bf16.msra.mxu0 0
        %1528 = vmatpush.bf16.msra.mxu0 0
        %1529 = vmatpush.bf16.msra.mxu0 0
        %1530 = vmatpush.bf16.msra.mxu0 0
        %1531 = vmatpush.bf16.msra.mxu0 0
        %1532 = vmatpush.bf16.msra.mxu0 0
        %1533 = vmatpush.bf16.msra.mxu0 %v1524
        %1534 = vmatmul.bf16.gmra.mxu0 %v1521
        %v1535 = vpop.f32.mrf.mxu0
        %v1536 = vadd.f32 0.0, %v1535
        %v1537 = vpop.f32.mrf.mxu0
        %1538 = vdwg.mxu0
        %v1539 = vunpack.c.l.b16 %v1264
        %v1540 = vpack.c.b16 %v1539, %v1539
        %1541 = vrot.lane.b32.xlu0 %v1540, 96
        %v1542 = vpop.permute.xlu0 %1541
        %v1544 = vsel %vm907, %v1469, 0
        %v1547 = vsel %vm911, %v1542, 0
        %1549 = vmatpush.bf16.msra.mxu0 0
        %1550 = vmatpush.bf16.msra.mxu0 0
        %1551 = vmatpush.bf16.msra.mxu0 0
        %1552 = vmatpush.bf16.msra.mxu0 0
        %1553 = vmatpush.bf16.msra.mxu0 0
        %1554 = vmatpush.bf16.msra.mxu0 0
        %1555 = vmatpush.bf16.msra.mxu0 0
        %1556 = vmatpush.bf16.msra.mxu0 %v1547
        %1557 = vmatmul.bf16.gmra.mxu0 %v1544
        %v1558 = vpop.f32.mrf.mxu0
        %v1559 = vadd.f32 0.0, %v1558
        %v1560 = vpop.f32.mrf.mxu0
        %1561 = vdwg.mxu0
        %v1562 = vpack.c.bf16 %v1490, %v1490
        %s1563 = scalar_lea.vmem [#allocation17], 16
        %v1564 = vld [vmem:[%s1563] sm:$0xf]
        %v1565 = vpack.c.bf16 %v1513, %v1513
        %s1566 = scalar_lea.vmem [#allocation17], 20
        %v1567 = vld [vmem:[%s1566] sm:$0xf]
        %v1569 = vsel %vm907, %v1565, 0
        %v1572 = vsel %vm911, %v1567, 0
        %1574 = vmatpush.bf16.msra.mxu0 0
        %1575 = vmatpush.bf16.msra.mxu0 0
        %1576 = vmatpush.bf16.msra.mxu0 0
        %1577 = vmatpush.bf16.msra.mxu0 0
        %1578 = vmatpush.bf16.msra.mxu0 0
        %1579 = vmatpush.bf16.msra.mxu0 0
        %1580 = vmatpush.bf16.msra.mxu0 0
        %1581 = vmatpush.bf16.msra.mxu0 %v1572
        %1582 = vmatmul.bf16.gmra.mxu0 %v1569
        %v1583 = vpop.f32.mrf.mxu0
        %v1584 = vadd.f32 0.0, %v1583
        %v1585 = vpop.f32.mrf.mxu0
        %1586 = vdwg.mxu0
        %v1588 = vsel %vm907, %v1562, 0
        %v1591 = vsel %vm911, %v1564, 0
        %1593 = vmatpush.bf16.msra.mxu0 0
        %1594 = vmatpush.bf16.msra.mxu0 0
        %1595 = vmatpush.bf16.msra.mxu0 0
        %1596 = vmatpush.bf16.msra.mxu0 0
        %1597 = vmatpush.bf16.msra.mxu0 0
        %1598 = vmatpush.bf16.msra.mxu0 0
        %1599 = vmatpush.bf16.msra.mxu0 0
        %1600 = vmatpush.bf16.msra.mxu0 %v1591
        %1601 = vmatmul.bf16.gmra.mxu0 %v1588
        %v1602 = vpop.f32.mrf.mxu0
        %v1603 = vadd.f32 %v1584, %v1602
        %v1604 = vpop.f32.mrf.mxu0
        %1605 = vdwg.mxu0
        %v1606 = vpack.c.bf16 %v1536, %v1536
        %s1607 = scalar_lea.vmem [#allocation17], 24
        %v1608 = vld [vmem:[%s1607] sm:$0xf]
        %v1610 = vsel %vm907, %v1606, 0
        %v1613 = vsel %vm911, %v1608, 0
        %1615 = vmatpush.bf16.msra.mxu0 0
        %1616 = vmatpush.bf16.msra.mxu0 0
        %1617 = vmatpush.bf16.msra.mxu0 0
        %1618 = vmatpush.bf16.msra.mxu0 0
        %1619 = vmatpush.bf16.msra.mxu0 0
        %1620 = vmatpush.bf16.msra.mxu0 0
        %1621 = vmatpush.bf16.msra.mxu0 0
        %1622 = vmatpush.bf16.msra.mxu0 %v1613
        %1623 = vmatmul.bf16.gmra.mxu0 %v1610
        %v1624 = vpop.f32.mrf.mxu0
        %v1625 = vadd.f32 0.0, %v1624
        %v1626 = vpop.f32.mrf.mxu0
        %1627 = vdwg.mxu0
        %v1628 = vadd.f32 %v1603, %v1625
        %v1629 = vpack.c.bf16 %v1559, %v1559
        %s1630 = scalar_lea.vmem [#allocation17], 28
        %v1631 = vld [vmem:[%s1630] sm:$0xf]
        %v1633 = vsel %vm907, %v1629, 0
        %v1636 = vsel %vm911, %v1631, 0
        %1638 = vmatpush.bf16.msra.mxu0 0
        %1639 = vmatpush.bf16.msra.mxu0 0
        %1640 = vmatpush.bf16.msra.mxu0 0
        %1641 = vmatpush.bf16.msra.mxu0 0
        %1642 = vmatpush.bf16.msra.mxu0 0
        %1643 = vmatpush.bf16.msra.mxu0 0
        %1644 = vmatpush.bf16.msra.mxu0 0
        %1645 = vmatpush.bf16.msra.mxu0 %v1636
        %1646 = vmatmul.bf16.gmra.mxu0 %v1633
        %v1647 = vpop.f32.mrf.mxu0
        %v1648 = vadd.f32 0.0, %v1647
        %v1649 = vpop.f32.mrf.mxu0
        %1650 = vdwg.mxu0
        %v1651 = vadd.f32 %v1628, %v1648
        %s1652 = scalar_lea.vmem %s12, 1
        %v1653 = vld [vmem:[%s1652] sm:$0x1]
        %v1655 = vperm.slane %v1653, 0
        %v1657 = vadd.f32 %v1651, %v1655
        %s1658 = scalar_lea.vmem %s646, 8 [#allocation19]
        %1659 = vst.msk [vmem:[%s1658] sm:$0xff] %vm671, %v1657
        %s1660 = scalar_lea.vmem [#allocation16], 32
        %v1661 = vld [vmem:[%s1660] sm:$0xf]
        %v1662 = vld [vmem:[%s1660 + $0x4] sm:$0xf]
        %v1663 = vld [vmem:[%s1660 + $0x8] sm:$0xf]
        %v1664 = vld [vmem:[%s1660 + $0xc] sm:$0xf]
        %s1665 = scalar_lea.vmem %s10, 2
        %v1666 = vld [vmem:[%s1665] sm:$0x1]
        %v1668 = vperm.slane %v1666, 0
        %v1674 = vunpack.c.l.b16 %v1661
        %v1675 = vunpack.c.l.b16 %v1662
        %v1676 = vunpack.c.l.b16 %v1663
        %v1677 = vunpack.c.l.b16 %v1664
        %v1678 = vpack.c.b16 %v1675, %v1674
        %v1679 = vpack.c.b16 %v1677, %v1676
        %1682 = vmatpush.bf16.msra.mxu0 0
        %1683 = vmatpush.bf16.msra.mxu0 0
        %1684 = vmatpush.bf16.msra.mxu0 0
        %1685 = vmatpush.bf16.msra.mxu0 0
        %1686 = vmatpush.bf16.msra.mxu0 0
        %1687 = vmatpush.bf16.msra.mxu0 0
        %1688 = vmatpush.bf16.msra.mxu0 %v1679
        %1689 = vmatpush.bf16.msra.mxu0 %v1678
        %1690 = vmatmul.bf16.gmra.mxu0 %v733
        %v1691 = vpop.f32.mrf.mxu0
        %v1692 = vadd.f32 %v1668, %v1691
        %v1693 = vpop.f32.mrf.mxu0
        %1694 = vdwg.mxu0
        %v1695 = vpack.c.bf16 %v1692, %v1692
        %1697 = vrot.lane.b32.xlu0 %v1695, 120
        %v1698 = vpop.permute.xlu0 %1697
        %1700 = vrot.lane.b32.xlu0 %v1695, 112
        %v1701 = vpop.permute.xlu0 %1700
        %1703 = vrot.lane.b32.xlu0 %v1695, 104
        %v1704 = vpop.permute.xlu0 %1703
        %1706 = vxpose.xlu0.c.b16.start [1/8] %v1695, 128
        %1707 = vxpose.xlu0.c.b16.cont [2/8] 0, 128
        %1708 = vxpose.xlu0.c.b16.cont [3/8] 0, 128
        %1709 = vxpose.xlu0.c.b16.cont [4/8] 0, 128
        %1710 = vxpose.xlu0.c.b16.cont [5/8] 0, 128
        %1711 = vxpose.xlu0.c.b16.cont [6/8] 0, 128
        %1712 = vxpose.xlu0.c.b16.cont [7/8] 0, 128
        %1713 = vxpose.xlu0.c.b16.end [8/8] 0, 128
        %v1714 = vpop.trf.xlu0
        %v1715 = vpop.trf.xlu0
        %v1716 = vpop.trf.xlu0
        %v1717 = vpop.trf.xlu0
        %v1718 = vpop.trf.xlu0
        %v1719 = vpop.trf.xlu0
        %v1720 = vpop.trf.xlu0
        %v1721 = vpop.trf.xlu0
        %1722 = vxpose.xlu0.c.b16.start [1/8] %v1698, 128
        %1723 = vxpose.xlu0.c.b16.cont [2/8] 0, 128
        %1724 = vxpose.xlu0.c.b16.cont [3/8] 0, 128
        %1725 = vxpose.xlu0.c.b16.cont [4/8] 0, 128
        %1726 = vxpose.xlu0.c.b16.cont [5/8] 0, 128
        %1727 = vxpose.xlu0.c.b16.cont [6/8] 0, 128
        %1728 = vxpose.xlu0.c.b16.cont [7/8] 0, 128
        %1729 = vxpose.xlu0.c.b16.end [8/8] 0, 128
        %v1730 = vpop.trf.xlu0
        %v1731 = vpop.trf.xlu0
        %v1732 = vpop.trf.xlu0
        %v1733 = vpop.trf.xlu0
        %v1734 = vpop.trf.xlu0
        %v1735 = vpop.trf.xlu0
        %v1736 = vpop.trf.xlu0
        %v1737 = vpop.trf.xlu0
        %1738 = vxpose.xlu0.c.b16.start [1/8] %v1701, 128
        %1739 = vxpose.xlu0.c.b16.cont [2/8] 0, 128
        %1740 = vxpose.xlu0.c.b16.cont [3/8] 0, 128
        %1741 = vxpose.xlu0.c.b16.cont [4/8] 0, 128
        %1742 = vxpose.xlu0.c.b16.cont [5/8] 0, 128
        %1743 = vxpose.xlu0.c.b16.cont [6/8] 0, 128
        %1744 = vxpose.xlu0.c.b16.cont [7/8] 0, 128
        %1745 = vxpose.xlu0.c.b16.end [8/8] 0, 128
        %v1746 = vpop.trf.xlu0
        %v1747 = vpop.trf.xlu0
        %v1748 = vpop.trf.xlu0
        %v1749 = vpop.trf.xlu0
        %v1750 = vpop.trf.xlu0
        %v1751 = vpop.trf.xlu0
        %v1752 = vpop.trf.xlu0
        %v1753 = vpop.trf.xlu0
        %1754 = vxpose.xlu0.c.b16.start [1/8] %v1704, 128
        %1755 = vxpose.xlu0.c.b16.cont [2/8] 0, 128
        %1756 = vxpose.xlu0.c.b16.cont [3/8] 0, 128
        %1757 = vxpose.xlu0.c.b16.cont [4/8] 0, 128
        %1758 = vxpose.xlu0.c.b16.cont [5/8] 0, 128
        %1759 = vxpose.xlu0.c.b16.cont [6/8] 0, 128
        %1760 = vxpose.xlu0.c.b16.cont [7/8] 0, 128
        %1761 = vxpose.xlu0.c.b16.end [8/8] 0, 128
        %v1762 = vpop.trf.xlu0
        %v1763 = vpop.trf.xlu0
        %v1764 = vpop.trf.xlu0
        %v1765 = vpop.trf.xlu0
        %v1766 = vpop.trf.xlu0
        %v1767 = vpop.trf.xlu0
        %v1768 = vpop.trf.xlu0
        %v1769 = vpop.trf.xlu0
        %1770 = vrot.lane.b32.xlu0 %v1331, 64
        %v1771 = vpop.permute.xlu0 %1770
        %v1773 = vsel %vm907, %v1771, 0
        %v1776 = vsel %vm911, %v1714, 0
        %1778 = vmatpush.bf16.msra.mxu0 0
        %1779 = vmatpush.bf16.msra.mxu0 0
        %1780 = vmatpush.bf16.msra.mxu0 0
        %1781 = vmatpush.bf16.msra.mxu0 0
        %1782 = vmatpush.bf16.msra.mxu0 0
        %1783 = vmatpush.bf16.msra.mxu0 0
        %1784 = vmatpush.bf16.msra.mxu0 0
        %1785 = vmatpush.bf16.msra.mxu0 %v1776
        %1786 = vmatmul.bf16.gmra.mxu0 %v1773
        %v1787 = vpop.f32.mrf.mxu0
        %v1788 = vadd.f32 0.0, %v1787
        %v1789 = vpop.f32.mrf.mxu0
        %1790 = vdwg.mxu0
        %1791 = vrot.lane.b32.xlu0 %v1354, 64
        %v1792 = vpop.permute.xlu0 %1791
        %v1794 = vsel %vm907, %v1792, 0
        %v1797 = vsel %vm911, %v1730, 0
        %1799 = vmatpush.bf16.msra.mxu0 0
        %1800 = vmatpush.bf16.msra.mxu0 0
        %1801 = vmatpush.bf16.msra.mxu0 0
        %1802 = vmatpush.bf16.msra.mxu0 0
        %1803 = vmatpush.bf16.msra.mxu0 0
        %1804 = vmatpush.bf16.msra.mxu0 0
        %1805 = vmatpush.bf16.msra.mxu0 0
        %1806 = vmatpush.bf16.msra.mxu0 %v1797
        %1807 = vmatmul.bf16.gmra.mxu0 %v1794
        %v1808 = vpop.f32.mrf.mxu0
        %v1809 = vadd.f32 0.0, %v1808
        %v1810 = vpop.f32.mrf.mxu0
        %1811 = vdwg.mxu0
        %1812 = vrot.lane.b32.xlu0 %v1377, 64
        %v1813 = vpop.permute.xlu0 %1812
        %v1815 = vsel %vm907, %v1813, 0
        %v1818 = vsel %vm911, %v1746, 0
        %1820 = vmatpush.bf16.msra.mxu0 0
        %1821 = vmatpush.bf16.msra.mxu0 0
        %1822 = vmatpush.bf16.msra.mxu0 0
        %1823 = vmatpush.bf16.msra.mxu0 0
        %1824 = vmatpush.bf16.msra.mxu0 0
        %1825 = vmatpush.bf16.msra.mxu0 0
        %1826 = vmatpush.bf16.msra.mxu0 0
        %1827 = vmatpush.bf16.msra.mxu0 %v1818
        %1828 = vmatmul.bf16.gmra.mxu0 %v1815
        %v1829 = vpop.f32.mrf.mxu0
        %v1830 = vadd.f32 0.0, %v1829
        %v1831 = vpop.f32.mrf.mxu0
        %1832 = vdwg.mxu0
        %1833 = vrot.lane.b32.xlu0 %v1400, 64
        %v1834 = vpop.permute.xlu0 %1833
        %v1836 = vsel %vm907, %v1834, 0
        %v1839 = vsel %vm911, %v1762, 0
        %1841 = vmatpush.bf16.msra.mxu0 0
        %1842 = vmatpush.bf16.msra.mxu0 0
        %1843 = vmatpush.bf16.msra.mxu0 0
        %1844 = vmatpush.bf16.msra.mxu0 0
        %1845 = vmatpush.bf16.msra.mxu0 0
        %1846 = vmatpush.bf16.msra.mxu0 0
        %1847 = vmatpush.bf16.msra.mxu0 0
        %1848 = vmatpush.bf16.msra.mxu0 %v1839
        %1849 = vmatmul.bf16.gmra.mxu0 %v1836
        %v1850 = vpop.f32.mrf.mxu0
        %v1851 = vadd.f32 0.0, %v1850
        %v1852 = vpop.f32.mrf.mxu0
        %1853 = vdwg.mxu0
        %v1854 = vsel %vm907, %v1788, -inf
        %1855 = vmax.xlane.f32.xlu0 %v1854
        %v1856 = vpop.xlane.xlu0 %1855
        %v1857 = vsel %vm907, %v1809, -inf
        %1858 = vmax.xlane.f32.xlu0 %v1857
        %v1859 = vpop.xlane.xlu0 %1858
        %v1860 = vsel %vm907, %v1830, -inf
        %1861 = vmax.xlane.f32.xlu0 %v1860
        %v1862 = vpop.xlane.xlu0 %1861
        %v1863 = vsel %vm907, %v1851, -inf
        %1864 = vmax.xlane.f32.xlu0 %v1863
        %v1865 = vpop.xlane.xlu0 %1864
        %v1866 = vsub.f32 %v1788, %v1856
        %v1867 = vsub.f32 %v1809, %v1859
        %v1868 = vsub.f32 %v1830, %v1862
        %v1869 = vsub.f32 %v1851, %v1865
        %v1870 = vmul.f32 %v1866, 1.442695
        %v1871 = vpow.pop %v1870
        %v1872 = vmul.f32 %v1867, 1.442695
        %v1873 = vpow.pop %v1872
        %v1874 = vmul.f32 %v1868, 1.442695
        %v1875 = vpow.pop %v1874
        %v1876 = vmul.f32 %v1869, 1.442695
        %v1877 = vpow.pop %v1876
        %v1878 = vsel %vm907, %v1871, 0.0
        %1879 = vadd.xlane.f32.xlu0 %v1878
        %v1880 = vpop.xlane.xlu0 %1879
        %v1881 = vsel %vm907, %v1873, 0.0
        %1882 = vadd.xlane.f32.xlu0 %v1881
        %v1883 = vpop.xlane.xlu0 %1882
        %v1884 = vsel %vm907, %v1875, 0.0
        %1885 = vadd.xlane.f32.xlu0 %v1884
        %v1886 = vpop.xlane.xlu0 %1885
        %v1887 = vsel %vm907, %v1877, 0.0
        %1888 = vadd.xlane.f32.xlu0 %v1887
        %v1889 = vpop.xlane.xlu0 %1888
        %v1890 = vrcp.pop %v1880
        %v1891 = vrcp.pop %v1883
        %v1892 = vrcp.pop %v1886
        %v1893 = vrcp.pop %v1889
        %v1894 = vmul.f32 %v1871, %v1890
        %v1895 = vmul.f32 %v1873, %v1891
        %v1896 = vmul.f32 %v1875, %v1892
        %v1897 = vmul.f32 %v1877, %v1893
        %v1898 = vpack.c.bf16 %v1894, %v1894
        %v1899 = vpack.c.bf16 %v1895, %v1895
        %v1900 = vpack.c.bf16 %v1896, %v1896
        %v1901 = vpack.c.bf16 %v1897, %v1897
        %v1902 = vunpack.c.l.b16 %v1695
        %v1903 = vpack.c.b16 %v1902, %v1902
        %1904 = vrot.lane.b32.xlu0 %v1903, 96
        %v1905 = vpop.permute.xlu0 %1904
        %v1907 = vsel %vm907, %v1898, 0
        %v1910 = vsel %vm911, %v1905, 0
        %1912 = vmatpush.bf16.msra.mxu0 0
        %1913 = vmatpush.bf16.msra.mxu0 0
        %1914 = vmatpush.bf16.msra.mxu0 0
        %1915 = vmatpush.bf16.msra.mxu0 0
        %1916 = vmatpush.bf16.msra.mxu0 0
        %1917 = vmatpush.bf16.msra.mxu0 0
        %1918 = vmatpush.bf16.msra.mxu0 0
        %1919 = vmatpush.bf16.msra.mxu0 %v1910
        %1920 = vmatmul.bf16.gmra.mxu0 %v1907
        %v1921 = vpop.f32.mrf.mxu0
        %v1922 = vadd.f32 0.0, %v1921
        %v1923 = vpop.f32.mrf.mxu0
        %1924 = vdwg.mxu0
        %v1925 = vunpack.c.l.b16 %v1698
        %v1926 = vpack.c.b16 %v1925, %v1925
        %1927 = vrot.lane.b32.xlu0 %v1926, 96
        %v1928 = vpop.permute.xlu0 %1927
        %v1930 = vsel %vm907, %v1899, 0
        %v1933 = vsel %vm911, %v1928, 0
        %1935 = vmatpush.bf16.msra.mxu0 0
        %1936 = vmatpush.bf16.msra.mxu0 0
        %1937 = vmatpush.bf16.msra.mxu0 0
        %1938 = vmatpush.bf16.msra.mxu0 0
        %1939 = vmatpush.bf16.msra.mxu0 0
        %1940 = vmatpush.bf16.msra.mxu0 0
        %1941 = vmatpush.bf16.msra.mxu0 0
        %1942 = vmatpush.bf16.msra.mxu0 %v1933
        %1943 = vmatmul.bf16.gmra.mxu0 %v1930
        %v1944 = vpop.f32.mrf.mxu0
        %v1945 = vadd.f32 0.0, %v1944
        %v1946 = vpop.f32.mrf.mxu0
        %1947 = vdwg.mxu0
        %v1948 = vunpack.c.l.b16 %v1701
        %v1949 = vpack.c.b16 %v1948, %v1948
        %1950 = vrot.lane.b32.xlu0 %v1949, 96
        %v1951 = vpop.permute.xlu0 %1950
        %v1953 = vsel %vm907, %v1900, 0
        %v1956 = vsel %vm911, %v1951, 0
        %1958 = vmatpush.bf16.msra.mxu0 0
        %1959 = vmatpush.bf16.msra.mxu0 0
        %1960 = vmatpush.bf16.msra.mxu0 0
        %1961 = vmatpush.bf16.msra.mxu0 0
        %1962 = vmatpush.bf16.msra.mxu0 0
        %1963 = vmatpush.bf16.msra.mxu0 0
        %1964 = vmatpush.bf16.msra.mxu0 0
        %1965 = vmatpush.bf16.msra.mxu0 %v1956
        %1966 = vmatmul.bf16.gmra.mxu0 %v1953
        %v1967 = vpop.f32.mrf.mxu0
        %v1968 = vadd.f32 0.0, %v1967
        %v1969 = vpop.f32.mrf.mxu0
        %1970 = vdwg.mxu0
        %v1971 = vunpack.c.l.b16 %v1704
        %v1972 = vpack.c.b16 %v1971, %v1971
        %1973 = vrot.lane.b32.xlu0 %v1972, 96
        %v1974 = vpop.permute.xlu0 %1973
        %v1976 = vsel %vm907, %v1901, 0
        %v1979 = vsel %vm911, %v1974, 0
        %1981 = vmatpush.bf16.msra.mxu0 0
        %1982 = vmatpush.bf16.msra.mxu0 0
        %1983 = vmatpush.bf16.msra.mxu0 0
        %1984 = vmatpush.bf16.msra.mxu0 0
        %1985 = vmatpush.bf16.msra.mxu0 0
        %1986 = vmatpush.bf16.msra.mxu0 0
        %1987 = vmatpush.bf16.msra.mxu0 0
        %1988 = vmatpush.bf16.msra.mxu0 %v1979
        %1989 = vmatmul.bf16.gmra.mxu0 %v1976
        %v1990 = vpop.f32.mrf.mxu0
        %v1991 = vadd.f32 0.0, %v1990
        %v1992 = vpop.f32.mrf.mxu0
        %1993 = vdwg.mxu0
        %v1994 = vpack.c.bf16 %v1922, %v1922
        %s1995 = scalar_lea.vmem [#allocation17], 32
        %v1996 = vld [vmem:[%s1995] sm:$0xf]
        %v1997 = vpack.c.bf16 %v1945, %v1945
        %s1998 = scalar_lea.vmem [#allocation17], 36
        %v1999 = vld [vmem:[%s1998] sm:$0xf]
        %v2001 = vsel %vm907, %v1997, 0
        %v2004 = vsel %vm911, %v1999, 0
        %2006 = vmatpush.bf16.msra.mxu0 0
        %2007 = vmatpush.bf16.msra.mxu0 0
        %2008 = vmatpush.bf16.msra.mxu0 0
        %2009 = vmatpush.bf16.msra.mxu0 0
        %2010 = vmatpush.bf16.msra.mxu0 0
        %2011 = vmatpush.bf16.msra.mxu0 0
        %2012 = vmatpush.bf16.msra.mxu0 0
        %2013 = vmatpush.bf16.msra.mxu0 %v2004
        %2014 = vmatmul.bf16.gmra.mxu0 %v2001
        %v2015 = vpop.f32.mrf.mxu0
        %v2016 = vadd.f32 0.0, %v2015
        %v2017 = vpop.f32.mrf.mxu0
        %2018 = vdwg.mxu0
        %v2020 = vsel %vm907, %v1994, 0
        %v2023 = vsel %vm911, %v1996, 0
        %2025 = vmatpush.bf16.msra.mxu0 0
        %2026 = vmatpush.bf16.msra.mxu0 0
        %2027 = vmatpush.bf16.msra.mxu0 0
        %2028 = vmatpush.bf16.msra.mxu0 0
        %2029 = vmatpush.bf16.msra.mxu0 0
        %2030 = vmatpush.bf16.msra.mxu0 0
        %2031 = vmatpush.bf16.msra.mxu0 0
        %2032 = vmatpush.bf16.msra.mxu0 %v2023
        %2033 = vmatmul.bf16.gmra.mxu0 %v2020
        %v2034 = vpop.f32.mrf.mxu0
        %v2035 = vadd.f32 %v2016, %v2034
        %v2036 = vpop.f32.mrf.mxu0
        %2037 = vdwg.mxu0
        %v2038 = vpack.c.bf16 %v1968, %v1968
        %s2039 = scalar_lea.vmem [#allocation17], 40
        %v2040 = vld [vmem:[%s2039] sm:$0xf]
        %v2042 = vsel %vm907, %v2038, 0
        %v2045 = vsel %vm911, %v2040, 0
        %2047 = vmatpush.bf16.msra.mxu0 0
        %2048 = vmatpush.bf16.msra.mxu0 0
        %2049 = vmatpush.bf16.msra.mxu0 0
        %2050 = vmatpush.bf16.msra.mxu0 0
        %2051 = vmatpush.bf16.msra.mxu0 0
        %2052 = vmatpush.bf16.msra.mxu0 0
        %2053 = vmatpush.bf16.msra.mxu0 0
        %2054 = vmatpush.bf16.msra.mxu0 %v2045
        %2055 = vmatmul.bf16.gmra.mxu0 %v2042
        %v2056 = vpop.f32.mrf.mxu0
        %v2057 = vadd.f32 0.0, %v2056
        %v2058 = vpop.f32.mrf.mxu0
        %2059 = vdwg.mxu0
        %v2060 = vadd.f32 %v2035, %v2057
        %v2061 = vpack.c.bf16 %v1991, %v1991
        %s2062 = scalar_lea.vmem [#allocation17], 44
        %v2063 = vld [vmem:[%s2062] sm:$0xf]
        %v2065 = vsel %vm907, %v2061, 0
        %v2068 = vsel %vm911, %v2063, 0
        %2070 = vmatpush.bf16.msra.mxu0 0
        %2071 = vmatpush.bf16.msra.mxu0 0
        %2072 = vmatpush.bf16.msra.mxu0 0
        %2073 = vmatpush.bf16.msra.mxu0 0
        %2074 = vmatpush.bf16.msra.mxu0 0
        %2075 = vmatpush.bf16.msra.mxu0 0
        %2076 = vmatpush.bf16.msra.mxu0 0
        %2077 = vmatpush.bf16.msra.mxu0 %v2068
        %2078 = vmatmul.bf16.gmra.mxu0 %v2065
        %v2079 = vpop.f32.mrf.mxu0
        %v2080 = vadd.f32 0.0, %v2079
        %v2081 = vpop.f32.mrf.mxu0
        %2082 = vdwg.mxu0
        %v2083 = vadd.f32 %v2060, %v2080
        %s2084 = scalar_lea.vmem %s12, 2
        %v2085 = vld [vmem:[%s2084] sm:$0x1]
        %v2087 = vperm.slane %v2085, 0
        %v2089 = vadd.f32 %v2083, %v2087
        %s2090 = scalar_lea.vmem %s646, 16 [#allocation19]
        %2091 = vst.msk [vmem:[%s2090] sm:$0xff] %vm671, %v2089
        %s2092 = sand.u32 %s333, 1
        %s2093 = scalar_lea.sflag [#allocation4], %s2092
        %s2094 = sand.u32 %s333, 1
        %s2095 = smul.addr %s2094, 24
        %s2096 = scalar_lea.vmem [#allocation19], %s2095
        // Predicated region
        $region113: #{tpu_custom_call.1} parent=71 // pred_check
          %p2097 = pneg %p343
        $region114: #{tpu_custom_call.1} parent=71 // pred_check_branch
          %2099 = sbr.rel (%p2097) target = $region116
        $region115: #{tpu_custom_call.1} parent=71 // pred_region
          %2101 = vsyncadd %s2093, 0
          %s2102 = smul.addr %s37, 3
          %s2103 = smul.addr %s2102, 8
          %s2104 = scalar_lea.hbm %s13, %s2103
          %s2105 = sshll.u32 %s2096, 4
          %s2106 = int_to_ptr.vmem [resolvable:$true] %s2105
          %s2107 = sshll.u32 %s2104, 4
          %s2108 = int_to_ptr.hbm [resolvable:$true] %s2107
          %2113 = dma.vmem_to_hbm [thread:$0]  %s2106, 384, %s2108, %s2093, 128, 128, 8
        $region116: #{tpu_custom_call.1} parent=71 // pred_fallthru
          _
      $region72: #{tpu_custom_call.1} parent=5 // pred_fallthru
        _
      %p2114 = scmp.le.s32.totalorder 2, %s32
      // Predicated region
      $region117: #{tpu_custom_call.1} parent=5 // pred_check
        %p2115 = pneg %p2114
      $region118: #{tpu_custom_call.1} parent=5 // pred_check_branch
        %2117 = sbr.rel (%p2115) target = $region120
      $region119: #{tpu_custom_call.1} parent=5 // pred_region
        %s2118 = ssub.s32 %s32, 2
        // Predicated region
        $region121: #{tpu_custom_call.1} parent=119 // pred_check
          %p2119 = pneg %p349
        $region122: #{tpu_custom_call.1} parent=119 // pred_check_branch
          %2121 = sbr.rel (%p2119) target = $region124
        $region123: #{tpu_custom_call.1} parent=119 // pred_region
          %s2122 = sand.u32 %s334, 1
          %s2123 = scalar_lea.sflag [#allocation4], %s2122
          %s2124 = sand.u32 %s334, 1
          %s2125 = smul.addr %s2124, 24
          %s2126 = scalar_lea.vmem [#allocation19], %s2125
          %2128 = dma.done %s2123, 384
        $region124: #{tpu_custom_call.1} parent=119 // pred_fallthru
          _
      $region120: #{tpu_custom_call.1} parent=5 // pred_fallthru
        _
    $region6: #{tpu_custom_call.1} parent=1 // loop_footer
      %s36 = sadd.s32 1, %s32
    $region7: #{tpu_custom_call.1} parent=1 // loop_footer_branch
      %31 = sbr.rel target = $region3
    $region8: #{tpu_custom_call.1} parent=1 // loop_exit
      _
    %2129 = vsyncpa [#allocation3], 1
    %s2130 = scalar_lea.sflag [#allocation3], 1
    %2131 = vsyncpa %s2130, 1
    %2132 = vsyncpa [#allocation6], 1
    %s2133 = scalar_lea.sflag [#allocation6], 1
    %2134 = vsyncpa %s2133, 1
    %2135 = vsyncpa [#allocation9], 1
    %2136 = vsyncpa [#allocation12], 1
    %2137 = vsyncpa [#allocation15], 1
    %2138 = vsyncpa [#allocation18], 1
    %2139 = vsyncpa [#allocation4], 1
    %s2140 = scalar_lea.sflag [#allocation4], 1
    %2141 = vsyncpa %s2140, 1

</llo_original>
